<compile_context>
chip_gen: v7x
topology: tpu7x:2x2x1
jax: 0.10.0
libtpu: 0.0.40
codegen_flags: <defaults>
</compile_context>

<pallas_src>
import math

import jax
import jax.numpy as jnp
import numpy as np
from jax.experimental import pallas as pl
from jax.experimental.pallas import tpu as pltpu


# ----------------------------------------------------------------------------
# Fused kernel factory
# ----------------------------------------------------------------------------
def _make_fused_kernel(S, B, H, D, scaling):
    E = H * D
    SB = S * B
    f32 = jnp.float32

    def _linear_t(x, w):
        # y = x @ w.T  (PyTorch nn.Linear layout, contracted in-kernel -> MXU)
        return jax.lax.dot_general(
            x, w, (((1,), (1,)), ((), ())), preferred_element_type=f32)

    def _mm(a, b, dims):
        return jax.lax.dot_general(
            a, b, (dims, ((), ())), preferred_element_type=f32)

    def kernel(xq_ref, xkv_ref, wq_ref, wk_ref, wv_ref, wo_ref,
               bq_ref, bk_ref, bv_ref, bo_ref,
               hsum_ref, rep_ref, sel_ref,
               out_ref, w_ref):
        xq = xq_ref[0].astype(f32)        # (B, E)     query at target step t
        xkv = xkv_ref[0].astype(f32)      # (S*B, Kd)  key/value bank at step t

        # ---- projections: lane-dense MXU matmuls, fused bias --------------
        q = (_linear_t(xq, wq_ref[...]) + bq_ref[...]) * scaling   # (B, E)
        k = _linear_t(xkv, wk_ref[...]) + bk_ref[...]              # (SB, E)
        v = _linear_t(xkv, wv_ref[...]) + bv_ref[...]              # (SB, E)

        rep = rep_ref[...]     # (SB, B): rep[s*B+b, b'] = [b == b']
        hsum = hsum_ref[...]   # (E, H) : hsum[e, h]     = [e // D == h]
        sel = sel_ref[...]     # (SB, S): sel[s*B+b, s'] = [s == s']

        # replicate q over the S source positions of its own bank
        q_rep = _mm(rep, q, ((1,), (0,)))                          # (SB, E)

        # per-head scores[s*B+b, h] = sum_d q[b, h*D+d] * k[s*B+b, h*D+d]
        scores = _mm(q_rep * k, hsum, ((1,), (0,)))                # (SB, H)

        # numerically stable softmax over s, independently per (b, h)
        m = scores[0:B, :]
        for s in range(1, S):                                      # S is small/static
            m = jnp.maximum(m, scores[s * B:(s + 1) * B, :])       # (B, H)
        e = jnp.exp(scores - _mm(rep, m, ((1,), (0,))))            # (SB, H)
        denom = _mm(rep, e, ((0,), (0,)))                          # (B, H)
        inv = pl.reciprocal(denom, approx=False)                   # exact 1/x
        p = e * _mm(rep, inv, ((1,), (0,)))                        # (SB, H)

        # head-mean attention weights, emitted lane-dense as (B, S)
        pm = jnp.sum(p, axis=-1, keepdims=True) * (1.0 / H)        # (SB, 1)
        w_ref[0] = _mm(rep, pm * sel, ((0,), (0,))).astype(w_ref.dtype)   # (B, S)

        # broadcast per-head probs across head_dim lanes, weight v, sum over s
        p_full = _mm(p, hsum, ((1,), (1,)))                        # (SB, E)
        attn = _mm(rep, p_full * v, ((0,), (0,)))                  # (B, E)

        # fused out_proj
        out = _linear_t(attn, wo_ref[...]) + bo_ref[...]           # (B, E)
        out_ref[0] = out.astype(out_ref.dtype)

    return kernel


# ----------------------------------------------------------------------------
# Forward wrapper
# ----------------------------------------------------------------------------
def enc_dec_mha_forward(params, query, key_inp, num_heads):
    T, B, E = query.shape
    Tk, S, Bk, Kd = key_inp.shape
    assert Tk == T and Bk == B
    H = num_heads
    D = E // H
    SB = S * B
    scaling = D ** (-0.5)
    f32 = jnp.float32

    # free, contiguous merge of the (S, B) dims -> kernel sees a 2-D bank
    key2 = key_inp.reshape(T, SB, Kd)

    # constant 0/1 routing matrices (head segment-sum / batch replication /
    # source selection) -- let head split & reductions run on the MXU
    hsum = jnp.repeat(jnp.eye(H, dtype=f32), D, axis=0)        # (E, H)
    rep = jnp.tile(jnp.eye(B, dtype=f32), (S, 1))              # (SB, B)
    sel = jnp.repeat(jnp.eye(S, dtype=f32), B, axis=0)         # (SB, S)

    bq = params["bq"].reshape(1, E).astype(f32)
    bk = params["bk"].reshape(1, E).astype(f32)
    bv = params["bv"].reshape(1, E).astype(f32)
    bo = params["bo"].reshape(1, E).astype(f32)

    def resident(shape):
        rank = len(shape)
        return pl.BlockSpec(shape, lambda t, _r=rank: (0,) * _r)

    # TODO(synk): for very large S*B*Kd banks (v7x 64 MiB VMEM), add a batch
    # tile grid axis (tile multiple of 8) instead of the full-B block below.
    grid_spec = pltpu.PrefetchScalarGridSpec(
        num_scalar_prefetch=0,
        grid=(T,),
        in_specs=[
            pl.BlockSpec((1, B, E), lambda t: (t, 0, 0)),     # query step t
            pl.BlockSpec((1, SB, Kd), lambda t: (t, 0, 0)),   # key/value bank step t
            resident((E, E)),    # wq
            resident((E, Kd)),   # wk
            resident((E, Kd)),   # wv
            resident((E, E)),    # wo
            resident((1, E)), resident((1, E)), resident((1, E)), resident((1, E)),
            resident((E, H)),    # hsum
            resident((SB, B)),   # rep
            resident((SB, S)),   # sel
        ],
        out_specs=[
            pl.BlockSpec((1, B, E), lambda t: (t, 0, 0)),     # attention output
            pl.BlockSpec((1, B, S), lambda t: (t, 0, 0)),     # head-mean weights
        ],
    )

    kernel = _make_fused_kernel(S, B, H, D, scaling)
    out, w_tbs = pl.pallas_call(
        kernel,
        grid_spec=grid_spec,
        out_shape=(
            jax.ShapeDtypeStruct((T, B, E), query.dtype),
            jax.ShapeDtypeStruct((T, B, S), jnp.float32),
        ),
        compiler_params=pltpu.CompilerParams(
            dimension_semantics=("parallel",)),
    )(query, key2,
      params["wq"], params["wk"], params["wv"], params["wo"],
      bq, bk, bv, bo, hsum, rep, sel)

    attn_weights = jnp.transpose(w_tbs, (1, 0, 2))   # (B, T, S), tiny transpose
    return out, attn_weights


# ----------------------------------------------------------------------------
# Pure-JAX reference (mirrors the torch module exactly) for validation
# ----------------------------------------------------------------------------
def reference_forward(params, query, key_inp, num_heads):
    T, B, E = query.shape
    _, S, _, Kd = key_inp.shape
    H = num_heads
    D = E // H
    scaling = D ** (-0.5)

    lin = lambda x, w, b: x @ w.T + b
    q = lin(query, params["wq"], params["bq"]) * scaling               # (T, B, E)
    k = lin(key_inp, params["wk"], params["bk"])                       # (T, S, B, E)
    v = lin(key_inp, params["wv"], params["bv"])                       # (T, S, B, E)

    q = q.reshape(T, B * H, D).transpose(1, 0, 2)                      # (BH, T, D)
    k = k.reshape(T, S, B * H, D).transpose(2, 0, 1, 3)                # (BH, T, S, D)
    v = v.reshape(T, S, B * H, D).transpose(2, 0, 1, 3)                # (BH, T, S, D)

    scores = jnp.einsum("btd,btsd->bts", q, k)                         # (BH, T, S)
    p = jax.nn.softmax(scores.astype(jnp.float32), axis=-1)
    attn = jnp.einsum("bts,btsd->btd", p, v)                           # (BH, T, D)
    attn = attn.transpose(1, 0, 2).reshape(T, B, E)
    out = lin(attn, params["wo"], params["bo"])
    w = p.reshape(B, H, T, S).mean(axis=1)
    return out, w


# ----------------------------------------------------------------------------
# Deterministic parameter init (mirrors reset_parameters; synthetic, no ckpt)
# ----------------------------------------------------------------------------
def xavier_uniform(key, shape, gain=1.0):
    fan_out, fan_in = shape
    a = gain * math.sqrt(6.0 / (fan_in + fan_out))
    return jax.random.uniform(key, shape, jnp.float32, -a, a)


if __name__ == "__main__":
    # small shapes consistent with the module's forward
    T, S, B, E, H = 8, 8, 2, 32, 4    # tgt_len, src_len, bsz, embed_dim, num_heads
    root = jax.random.PRNGKey(0)
    ks = jax.random.split(root, 10)
    gain = 1.0 / math.sqrt(2.0)       # qkv_same_dim -> gain = 1/sqrt(2)

    params = {
        "wq": xavier_uniform(ks[0], (E, E), gain),
        "wk": xavier_uniform(ks[1], (E, E), gain),
        "wv": xavier_uniform(ks[2], (E, E), gain),
        "wo": xavier_uniform(ks[3], (E, E), 1.0),
        "bq": jax.random.uniform(ks[4], (E,), jnp.float32, -0.1, 0.1),
        "bk": jax.random.uniform(ks[5], (E,), jnp.float32, -0.1, 0.1),
        "bv": jax.random.uniform(ks[6], (E,), jnp.float32, -0.1, 0.1),
        "bo": jnp.zeros((E,), jnp.float32),   # out_proj bias initialized to 0
    }

    query = jax.random.normal(ks[7], (T, B, E), jnp.float32)
    key_inp = jax.random.normal(ks[8], (T, S, B, E), jnp.float32)

    fwd = jax.jit(enc_dec_mha_forward, static_argnums=(3,))
    attn, attn_weights = fwd(params, query, key_inp, H)
    jax.block_until_ready((attn, attn_weights))

    ref_attn, ref_w = reference_forward(params, query, key_inp, H)
    np.testing.assert_allclose(np.asarray(attn), np.asarray(ref_attn),
                               rtol=2e-5, atol=2e-5)
    np.testing.assert_allclose(np.asarray(attn_weights), np.asarray(ref_w),
                               rtol=2e-5, atol=2e-5)

    print("KERNEL_OK")
</pallas_src>

<mosaic_0001>
module attributes {stable_mosaic.version = 11 : i64} {
  func.func @kernel(%arg0: i32, %arg1: memref<1x2x32xf32, #tpu.memory_space<vmem>>, %arg2: memref<1x16x32xf32, #tpu.memory_space<vmem>>, %arg3: memref<32x32xf32, #tpu.memory_space<vmem>>, %arg4: memref<32x32xf32, #tpu.memory_space<vmem>>, %arg5: memref<32x32xf32, #tpu.memory_space<vmem>>, %arg6: memref<32x32xf32, #tpu.memory_space<vmem>>, %arg7: memref<1x32xf32, #tpu.memory_space<vmem>>, %arg8: memref<1x32xf32, #tpu.memory_space<vmem>>, %arg9: memref<1x32xf32, #tpu.memory_space<vmem>>, %arg10: memref<1x32xf32, #tpu.memory_space<vmem>>, %arg11: memref<32x4xf32, #tpu.memory_space<vmem>>, %arg12: memref<16x2xf32, #tpu.memory_space<vmem>>, %arg13: memref<16x8xf32, #tpu.memory_space<vmem>>, %arg14: memref<1x2x32xf32, #tpu.memory_space<vmem>>, %arg15: memref<1x2x8xf32, #tpu.memory_space<vmem>>) attributes {dimension_semantics = [#tpu.dimension_semantics<parallel>], iteration_bounds = array<i64: 8>, scalar_prefetch = 0 : i64, scratch_operands = 0 : i64, tpu.core_type = #tpu.core_type<tc>, window_params = [{transform_indices = @transform_0, window_bounds = array<i64: 1, 2, 32>}, {transform_indices = @transform_1, window_bounds = array<i64: 1, 16, 32>}, {pipeline_mode = #tpu.pipeline_mode<synchronous>, transform_indices = @transform_2, window_bounds = array<i64: 32, 32>}, {pipeline_mode = #tpu.pipeline_mode<synchronous>, transform_indices = @transform_3, window_bounds = array<i64: 32, 32>}, {pipeline_mode = #tpu.pipeline_mode<synchronous>, transform_indices = @transform_4, window_bounds = array<i64: 32, 32>}, {pipeline_mode = #tpu.pipeline_mode<synchronous>, transform_indices = @transform_5, window_bounds = array<i64: 32, 32>}, {pipeline_mode = #tpu.pipeline_mode<synchronous>, transform_indices = @transform_6, window_bounds = array<i64: 1, 32>}, {pipeline_mode = #tpu.pipeline_mode<synchronous>, transform_indices = @transform_7, window_bounds = array<i64: 1, 32>}, {pipeline_mode = #tpu.pipeline_mode<synchronous>, transform_indices = @transform_8, window_bounds = array<i64: 1, 32>}, {pipeline_mode = #tpu.pipeline_mode<synchronous>, transform_indices = @transform_9, window_bounds = array<i64: 1, 32>}, {pipeline_mode = #tpu.pipeline_mode<synchronous>, transform_indices = @transform_10, window_bounds = array<i64: 32, 4>}, {pipeline_mode = #tpu.pipeline_mode<synchronous>, transform_indices = @transform_11, window_bounds = array<i64: 16, 2>}, {pipeline_mode = #tpu.pipeline_mode<synchronous>, transform_indices = @transform_12, window_bounds = array<i64: 16, 8>}, {transform_indices = @transform_13, window_bounds = array<i64: 1, 2, 32>}, {transform_indices = @transform_14, window_bounds = array<i64: 1, 2, 8>}]} {
    %c0 = arith.constant 0 : index
    %c0_0 = arith.constant 0 : index
    %c0_1 = arith.constant 0 : index
    %0 = vector.load %arg1[%c0, %c0_0, %c0_1] : memref<1x2x32xf32, #tpu.memory_space<vmem>>, vector<1x2x32xf32>
    %1 = vector.shape_cast %0 : vector<1x2x32xf32> to vector<2x32xf32>
    %c0_2 = arith.constant 0 : index
    %c0_3 = arith.constant 0 : index
    %c0_4 = arith.constant 0 : index
    %2 = vector.load %arg2[%c0_2, %c0_3, %c0_4] : memref<1x16x32xf32, #tpu.memory_space<vmem>>, vector<1x16x32xf32>
    %3 = vector.shape_cast %2 : vector<1x16x32xf32> to vector<16x32xf32>
    %c0_5 = arith.constant 0 : index
    %c0_6 = arith.constant 0 : index
    %4 = vector.load %arg3[%c0_5, %c0_6] : memref<32x32xf32, #tpu.memory_space<vmem>>, vector<32x32xf32>
    %cst = arith.constant dense<0.000000e+00> : vector<2x32xf32>
    %5 = tpu.matmul %1, %4, %cst {dimension_numbers = #tpu.dot_dimension_numbers<[1], [1], [0], [0], [0, 0, 1, 0], [], []>} : vector<2x32xf32>, vector<32x32xf32>, vector<2x32xf32> -> vector<2x32xf32>
    %c0_7 = arith.constant 0 : index
    %c0_8 = arith.constant 0 : index
    %6 = vector.load %arg7[%c0_7, %c0_8] : memref<1x32xf32, #tpu.memory_space<vmem>>, vector<1x32xf32>
    %7 = vector.broadcast %6 : vector<1x32xf32> to vector<2x32xf32>
    %8 = arith.addf %5, %7 : vector<2x32xf32>
    %cst_9 = arith.constant 0.353553385 : f32
    %9 = vector.broadcast %cst_9 : f32 to vector<2x32xf32>
    %10 = arith.mulf %8, %9 : vector<2x32xf32>
    %c0_10 = arith.constant 0 : index
    %c0_11 = arith.constant 0 : index
    %11 = vector.load %arg4[%c0_10, %c0_11] : memref<32x32xf32, #tpu.memory_space<vmem>>, vector<32x32xf32>
    %cst_12 = arith.constant dense<0.000000e+00> : vector<16x32xf32>
    %12 = tpu.matmul %3, %11, %cst_12 {dimension_numbers = #tpu.dot_dimension_numbers<[1], [1], [0], [0], [0, 0, 1, 0], [], []>} : vector<16x32xf32>, vector<32x32xf32>, vector<16x32xf32> -> vector<16x32xf32>
    %c0_13 = arith.constant 0 : index
    %c0_14 = arith.constant 0 : index
    %13 = vector.load %arg8[%c0_13, %c0_14] : memref<1x32xf32, #tpu.memory_space<vmem>>, vector<1x32xf32>
    %14 = vector.broadcast %13 : vector<1x32xf32> to vector<16x32xf32>
    %15 = arith.addf %12, %14 : vector<16x32xf32>
    %c0_15 = arith.constant 0 : index
    %c0_16 = arith.constant 0 : index
    %16 = vector.load %arg5[%c0_15, %c0_16] : memref<32x32xf32, #tpu.memory_space<vmem>>, vector<32x32xf32>
    %cst_17 = arith.constant dense<0.000000e+00> : vector<16x32xf32>
    %17 = tpu.matmul %3, %16, %cst_17 {dimension_numbers = #tpu.dot_dimension_numbers<[1], [1], [0], [0], [0, 0, 1, 0], [], []>} : vector<16x32xf32>, vector<32x32xf32>, vector<16x32xf32> -> vector<16x32xf32>
    %c0_18 = arith.constant 0 : index
    %c0_19 = arith.constant 0 : index
    %18 = vector.load %arg9[%c0_18, %c0_19] : memref<1x32xf32, #tpu.memory_space<vmem>>, vector<1x32xf32>
    %19 = vector.broadcast %18 : vector<1x32xf32> to vector<16x32xf32>
    %20 = arith.addf %17, %19 : vector<16x32xf32>
    %c0_20 = arith.constant 0 : index
    %c0_21 = arith.constant 0 : index
    %21 = vector.load %arg12[%c0_20, %c0_21] : memref<16x2xf32, #tpu.memory_space<vmem>>, vector<16x2xf32>
    %c0_22 = arith.constant 0 : index
    %c0_23 = arith.constant 0 : index
    %22 = vector.load %arg11[%c0_22, %c0_23] : memref<32x4xf32, #tpu.memory_space<vmem>>, vector<32x4xf32>
    %c0_24 = arith.constant 0 : index
    %c0_25 = arith.constant 0 : index
    %23 = vector.load %arg13[%c0_24, %c0_25] : memref<16x8xf32, #tpu.memory_space<vmem>>, vector<16x8xf32>
    %cst_26 = arith.constant dense<0.000000e+00> : vector<16x32xf32>
    %24 = tpu.matmul %21, %10, %cst_26 {dimension_numbers = #tpu.dot_dimension_numbers<[1], [0], [0], [1], [0, 0, 1, 1], [], []>} : vector<16x2xf32>, vector<2x32xf32>, vector<16x32xf32> -> vector<16x32xf32>
    %25 = arith.mulf %24, %15 : vector<16x32xf32>
    %cst_27 = arith.constant dense<0.000000e+00> : vector<16x4xf32>
    %26 = tpu.matmul %25, %22, %cst_27 {dimension_numbers = #tpu.dot_dimension_numbers<[1], [0], [0], [1], [0, 0, 1, 1], [], []>} : vector<16x32xf32>, vector<32x4xf32>, vector<16x4xf32> -> vector<16x4xf32>
    %27 = vector.extract_strided_slice %26 {offsets = [0, 0], sizes = [2, 4], strides = [1, 1]} : vector<16x4xf32> to vector<2x4xf32>
    %28 = vector.extract_strided_slice %26 {offsets = [2, 0], sizes = [2, 4], strides = [1, 1]} : vector<16x4xf32> to vector<2x4xf32>
    %29 = arith.maximumf %27, %28 : vector<2x4xf32>
    %30 = vector.extract_strided_slice %26 {offsets = [4, 0], sizes = [2, 4], strides = [1, 1]} : vector<16x4xf32> to vector<2x4xf32>
    %31 = arith.maximumf %29, %30 : vector<2x4xf32>
    %32 = vector.extract_strided_slice %26 {offsets = [6, 0], sizes = [2, 4], strides = [1, 1]} : vector<16x4xf32> to vector<2x4xf32>
    %33 = arith.maximumf %31, %32 : vector<2x4xf32>
    %34 = vector.extract_strided_slice %26 {offsets = [8, 0], sizes = [2, 4], strides = [1, 1]} : vector<16x4xf32> to vector<2x4xf32>
    %35 = arith.maximumf %33, %34 : vector<2x4xf32>
    %36 = vector.extract_strided_slice %26 {offsets = [10, 0], sizes = [2, 4], strides = [1, 1]} : vector<16x4xf32> to vector<2x4xf32>
    %37 = arith.maximumf %35, %36 : vector<2x4xf32>
    %38 = vector.extract_strided_slice %26 {offsets = [12, 0], sizes = [2, 4], strides = [1, 1]} : vector<16x4xf32> to vector<2x4xf32>
    %39 = arith.maximumf %37, %38 : vector<2x4xf32>
    %40 = vector.extract_strided_slice %26 {offsets = [14, 0], sizes = [2, 4], strides = [1, 1]} : vector<16x4xf32> to vector<2x4xf32>
    %41 = arith.maximumf %39, %40 : vector<2x4xf32>
    %cst_28 = arith.constant dense<0.000000e+00> : vector<16x4xf32>
    %42 = tpu.matmul %21, %41, %cst_28 {dimension_numbers = #tpu.dot_dimension_numbers<[1], [0], [0], [1], [0, 0, 1, 1], [], []>} : vector<16x2xf32>, vector<2x4xf32>, vector<16x4xf32> -> vector<16x4xf32>
    %43 = arith.subf %26, %42 : vector<16x4xf32>
    %44 = math.exp %43 : vector<16x4xf32>
    %cst_29 = arith.constant dense<0.000000e+00> : vector<2x4xf32>
    %45 = tpu.matmul %21, %44, %cst_29 {dimension_numbers = #tpu.dot_dimension_numbers<[0], [0], [1], [1], [0, 1, 1, 1], [], []>} : vector<16x2xf32>, vector<16x4xf32>, vector<2x4xf32> -> vector<2x4xf32>
    %46 = tpu.reciprocal %45 : vector<2x4xf32> -> vector<2x4xf32>
    %cst_30 = arith.constant dense<0.000000e+00> : vector<16x4xf32>
    %47 = tpu.matmul %21, %46, %cst_30 {dimension_numbers = #tpu.dot_dimension_numbers<[1], [0], [0], [1], [0, 0, 1, 1], [], []>} : vector<16x2xf32>, vector<2x4xf32>, vector<16x4xf32> -> vector<16x4xf32>
    %48 = arith.mulf %44, %47 : vector<16x4xf32>
    %cst_31 = arith.constant dense<0.000000e+00> : vector<16xf32>
    %49 = vector.multi_reduction <add>, %48, %cst_31 [1] : vector<16x4xf32> to vector<16xf32>
    %50 = vector.shape_cast %49 : vector<16xf32> to vector<16x1xf32>
    %cst_32 = arith.constant 2.500000e-01 : f32
    %51 = vector.broadcast %cst_32 : f32 to vector<16x1xf32>
    %52 = arith.mulf %50, %51 : vector<16x1xf32>
    %53 = vector.broadcast %52 : vector<16x1xf32> to vector<16x8xf32>
    %54 = arith.mulf %53, %23 : vector<16x8xf32>
    %cst_33 = arith.constant dense<0.000000e+00> : vector<2x8xf32>
    %55 = tpu.matmul %21, %54, %cst_33 {dimension_numbers = #tpu.dot_dimension_numbers<[0], [0], [1], [1], [0, 1, 1, 1], [], []>} : vector<16x2xf32>, vector<16x8xf32>, vector<2x8xf32> -> vector<2x8xf32>
    %c0_34 = arith.constant 0 : index
    %c0_35 = arith.constant 0 : index
    %c0_36 = arith.constant 0 : index
    %56 = vector.load %arg15[%c0_34, %c0_35, %c0_36] : memref<1x2x8xf32, #tpu.memory_space<vmem>>, vector<1x2x8xf32>
    %57 = vector.shape_cast %56 : vector<1x2x8xf32> to vector<2x8xf32>
    %58 = vector.shape_cast %55 : vector<2x8xf32> to vector<1x2x8xf32>
    tpu.vector_store %arg15[%c0_34, %c0_35, %c0_36], %58 {strides = array<i32>} : memref<1x2x8xf32, #tpu.memory_space<vmem>>, vector<1x2x8xf32>,
    %cst_37 = arith.constant dense<0.000000e+00> : vector<16x32xf32>
    %59 = tpu.matmul %48, %22, %cst_37 {dimension_numbers = #tpu.dot_dimension_numbers<[1], [1], [0], [0], [0, 0, 1, 0], [], []>} : vector<16x4xf32>, vector<32x4xf32>, vector<16x32xf32> -> vector<16x32xf32>
    %60 = arith.mulf %59, %20 : vector<16x32xf32>
    %cst_38 = arith.constant dense<0.000000e+00> : vector<2x32xf32>
    %61 = tpu.matmul %21, %60, %cst_38 {dimension_numbers = #tpu.dot_dimension_numbers<[0], [0], [1], [1], [0, 1, 1, 1], [], []>} : vector<16x2xf32>, vector<16x32xf32>, vector<2x32xf32> -> vector<2x32xf32>
    %c0_39 = arith.constant 0 : index
    %c0_40 = arith.constant 0 : index
    %62 = vector.load %arg6[%c0_39, %c0_40] : memref<32x32xf32, #tpu.memory_space<vmem>>, vector<32x32xf32>
    %cst_41 = arith.constant dense<0.000000e+00> : vector<2x32xf32>
    %63 = tpu.matmul %61, %62, %cst_41 {dimension_numbers = #tpu.dot_dimension_numbers<[1], [1], [0], [0], [0, 0, 1, 0], [], []>} : vector<2x32xf32>, vector<32x32xf32>, vector<2x32xf32> -> vector<2x32xf32>
    %c0_42 = arith.constant 0 : index
    %c0_43 = arith.constant 0 : index
    %64 = vector.load %arg10[%c0_42, %c0_43] : memref<1x32xf32, #tpu.memory_space<vmem>>, vector<1x32xf32>
    %65 = vector.broadcast %64 : vector<1x32xf32> to vector<2x32xf32>
    %66 = arith.addf %63, %65 : vector<2x32xf32>
    %c0_44 = arith.constant 0 : index
    %c0_45 = arith.constant 0 : index
    %c0_46 = arith.constant 0 : index
    %67 = vector.load %arg14[%c0_44, %c0_45, %c0_46] : memref<1x2x32xf32, #tpu.memory_space<vmem>>, vector<1x2x32xf32>
    %68 = vector.shape_cast %67 : vector<1x2x32xf32> to vector<2x32xf32>
    %69 = vector.shape_cast %66 : vector<2x32xf32> to vector<1x2x32xf32>
    tpu.vector_store %arg14[%c0_44, %c0_45, %c0_46], %69 {strides = array<i32>} : memref<1x2x32xf32, #tpu.memory_space<vmem>>, vector<1x2x32xf32>,
    return
  }
  func.func @transform_0(%arg0: i32) -> (i32, i32, i32) {
    %c0_i32 = arith.constant 0 : i32
    %c0_i32_0 = arith.constant 0 : i32
    %c0_i32_1 = arith.constant 0 : i32
    return %arg0, %c0_i32, %c0_i32_0 : i32, i32, i32
  }
  func.func @transform_1(%arg0: i32) -> (i32, i32, i32) {
    %c0_i32 = arith.constant 0 : i32
    %c0_i32_0 = arith.constant 0 : i32
    %c0_i32_1 = arith.constant 0 : i32
    return %arg0, %c0_i32, %c0_i32_0 : i32, i32, i32
  }
  func.func @transform_2(%arg0: i32) -> (i32, i32) {
    %c0_i32 = arith.constant 0 : i32
    %c0_i32_0 = arith.constant 0 : i32
    %c0_i32_1 = arith.constant 0 : i32
    return %c0_i32, %c0_i32_0 : i32, i32
  }
  func.func @transform_3(%arg0: i32) -> (i32, i32) {
    %c0_i32 = arith.constant 0 : i32
    %c0_i32_0 = arith.constant 0 : i32
    %c0_i32_1 = arith.constant 0 : i32
    return %c0_i32, %c0_i32_0 : i32, i32
  }
  func.func @transform_4(%arg0: i32) -> (i32, i32) {
    %c0_i32 = arith.constant 0 : i32
    %c0_i32_0 = arith.constant 0 : i32
    %c0_i32_1 = arith.constant 0 : i32
    return %c0_i32, %c0_i32_0 : i32, i32
  }
  func.func @transform_5(%arg0: i32) -> (i32, i32) {
    %c0_i32 = arith.constant 0 : i32
    %c0_i32_0 = arith.constant 0 : i32
    %c0_i32_1 = arith.constant 0 : i32
    return %c0_i32, %c0_i32_0 : i32, i32
  }
  func.func @transform_6(%arg0: i32) -> (i32, i32) {
    %c0_i32 = arith.constant 0 : i32
    %c0_i32_0 = arith.constant 0 : i32
    %c0_i32_1 = arith.constant 0 : i32
    return %c0_i32, %c0_i32_0 : i32, i32
  }
  func.func @transform_7(%arg0: i32) -> (i32, i32) {
    %c0_i32 = arith.constant 0 : i32
    %c0_i32_0 = arith.constant 0 : i32
    %c0_i32_1 = arith.constant 0 : i32
    return %c0_i32, %c0_i32_0 : i32, i32
  }
  func.func @transform_8(%arg0: i32) -> (i32, i32) {
    %c0_i32 = arith.constant 0 : i32
    %c0_i32_0 = arith.constant 0 : i32
    %c0_i32_1 = arith.constant 0 : i32
    return %c0_i32, %c0_i32_0 : i32, i32
  }
  func.func @transform_9(%arg0: i32) -> (i32, i32) {
    %c0_i32 = arith.constant 0 : i32
    %c0_i32_0 = arith.constant 0 : i32
    %c0_i32_1 = arith.constant 0 : i32
    return %c0_i32, %c0_i32_0 : i32, i32
  }
  func.func @transform_10(%arg0: i32) -> (i32, i32) {
    %c0_i32 = arith.constant 0 : i32
    %c0_i32_0 = arith.constant 0 : i32
    %c0_i32_1 = arith.constant 0 : i32
    return %c0_i32, %c0_i32_0 : i32, i32
  }
  func.func @transform_11(%arg0: i32) -> (i32, i32) {
    %c0_i32 = arith.constant 0 : i32
    %c0_i32_0 = arith.constant 0 : i32
    %c0_i32_1 = arith.constant 0 : i32
    return %c0_i32, %c0_i32_0 : i32, i32
  }
  func.func @transform_12(%arg0: i32) -> (i32, i32) {
    %c0_i32 = arith.constant 0 : i32
    %c0_i32_0 = arith.constant 0 : i32
    %c0_i32_1 = arith.constant 0 : i32
    return %c0_i32, %c0_i32_0 : i32, i32
  }
  func.func @transform_13(%arg0: i32) -> (i32, i32, i32) {
    %c0_i32 = arith.constant 0 : i32
    %c0_i32_0 = arith.constant 0 : i32
    %c0_i32_1 = arith.constant 0 : i32
    return %arg0, %c0_i32, %c0_i32_0 : i32, i32, i32
  }
  func.func @transform_14(%arg0: i32) -> (i32, i32, i32) {
    %c0_i32 = arith.constant 0 : i32
    %c0_i32_0 = arith.constant 0 : i32
    %c0_i32_1 = arith.constant 0 : i32
    return %arg0, %c0_i32, %c0_i32_0 : i32, i32, i32
  }
}

</mosaic_0001>

<llo_original>
// kernel: enc_dec_mha_forward.1
$region0: #{enc_dec_mha_forward.1}
  #allocation0 [shape = 'u32[]', space=smem, size = 0x4, offset = 0x4, fixed_abs, tag = 'smem constant byte address 0x4 - core index']
  #allocation1 [shape = 'u32[144,128]{1,0:T(1,128)}', space=vmem, size = 0x12000, scoped, tag = 'internal scratch']
  %s0 = inlined_call_operand.hbm [shape: f32[8,2,32], index: 0, kind: input, shape index: {}]
  %s1 = inlined_call_operand.vmem [shape: f32[8,16,32], index: 1, kind: input, shape index: {}]
  %s2 = inlined_call_operand.vmem [shape: f32[32,32], index: 2, kind: input, shape index: {}]
  %s3 = inlined_call_operand.hbm [shape: f32[32,32], index: 3, kind: input, shape index: {}]
  %s4 = inlined_call_operand.hbm [shape: f32[32,32], index: 4, kind: input, shape index: {}]
  %s5 = inlined_call_operand.hbm [shape: f32[32,32], index: 5, kind: input, shape index: {}]
  %s6 = inlined_call_operand.vmem [shape: f32[1,32], index: 6, kind: input, shape index: {}]
  %s7 = inlined_call_operand.vmem [shape: f32[1,32], index: 7, kind: input, shape index: {}]
  %s8 = inlined_call_operand.vmem [shape: f32[1,32], index: 8, kind: input, shape index: {}]
  %s9 = inlined_call_operand.vmem [shape: f32[1,32], index: 9, kind: input, shape index: {}]
  %s10 = inlined_call_operand.vmem [shape: f32[32,4], index: 10, kind: input, shape index: {}]
  %s11 = inlined_call_operand.vmem [shape: f32[16,2], index: 11, kind: input, shape index: {}]
  %s12 = inlined_call_operand.vmem [shape: f32[16,8], index: 12, kind: input, shape index: {}]
  %s13 = inlined_call_operand.hbm [shape: f32[8,2,32], index: 13, kind: output, shape index: {0}]
  %s14 = inlined_call_operand.vmem [shape: f32[8,2,8], index: 14, kind: output, shape index: {1}]
  %15 = xla_tuple %s13, %s14
  %s16 = sld [smem:[#allocation0]]
  $region109: #{enc_dec_mha_forward.1} parent=0
    _
  %s18 = ssub.s32 1, %s16
  %s19 = scalar_select 0, %s18, %s16
  $region1: #{enc_dec_mha_forward.1} parent=0
    #allocation2 [shape = 'u8[2048]{0}', space=vmem, size = 0x800, scoped, tag = 'input window, operand 0']
    #allocation3 [shape = 's32[2]{0}', space=sflag, size = 0x8, scoped, tag = 'scoped memory for enc_dec_mha_forward.1']
    #allocation4 [shape = 's32[2]{0}', space=sflag, size = 0x8, scoped, tag = 'scoped memory for enc_dec_mha_forward.1']
    #allocation5 [shape = 'u8[16384]{0}', space=vmem, size = 0x4000, scoped, tag = 'input window, operand 3, single buffered']
    #allocation6 [shape = 's32[1]{0}', space=sflag, size = 0x4, scoped, tag = 'scoped memory for enc_dec_mha_forward.1']
    #allocation7 [shape = 'u8[16384]{0}', space=vmem, size = 0x4000, scoped, tag = 'input window, operand 4, single buffered']
    #allocation8 [shape = 'u8[16384]{0}', space=vmem, size = 0x4000, scoped, tag = 'input window, operand 5, single buffered']
    #allocation9 [shape = 's32[1]{0}', space=sflag, size = 0x4, scoped, tag = 'scoped memory for enc_dec_mha_forward.1']
    #allocation10 [shape = 'u8[2048]{0}', space=vmem, size = 0x800, scoped, tag = 'output window, operand 0']
    %20 = vsyncpa [#allocation3], 0
    %s21 = scalar_lea.sflag [#allocation3], 1
    %22 = vsyncpa %s21, 0
    %23 = vsyncpa [#allocation6], 0
    %24 = vsyncpa [#allocation9], 0
    %25 = vsyncpa [#allocation4], 0
    %s26 = scalar_lea.sflag [#allocation4], 1
    %27 = vsyncpa %s26, 0
    loop: start=0, step=1, limit=10
    $region2: #{enc_dec_mha_forward.1} parent=1 // loop_pre_header
      _
    $region3: #{enc_dec_mha_forward.1} parent=1 // loop_header
      %s29 = sphi 0, %s33
      %p30 = scmp.ge.s32.totalorder %s29, 10
      %s39 = sphi 0, %s41
      %s42 = sphi 0, %s39
      %s43 = sphi 0, %s42
      %s59 = sphi 0, %s43
      %s65 = sphi 0, %s67
      %s68 = sphi 0, %s65
      %s69 = sphi 0, %s68
      %s85 = sphi 0, %s69
      %s89 = sphi 0, %s89
      %s91 = sphi 0, %s89
      %s92 = sphi 0, %s91
      %s106 = sphi 0, %s92
      %s110 = sphi 0, %s110
      %s112 = sphi 0, %s110
      %s113 = sphi 0, %s112
      %s127 = sphi 0, %s113
      %s131 = sphi 0, %s131
      %s133 = sphi 0, %s131
      %s134 = sphi 0, %s133
      %s148 = sphi 0, %s134
      %s152 = sphi 0, %s152
      %s154 = sphi 0, %s152
      %s155 = sphi 0, %s154
      %s169 = sphi 0, %s155
      %s173 = sphi 0, %s173
      %s175 = sphi 0, %s173
      %s176 = sphi 0, %s175
      %s190 = sphi 0, %s176
      %s194 = sphi 0, %s194
      %s196 = sphi 0, %s194
      %s197 = sphi 0, %s196
      %s211 = sphi 0, %s197
      %s215 = sphi 0, %s215
      %s217 = sphi 0, %s215
      %s218 = sphi 0, %s217
      %s232 = sphi 0, %s218
      %s236 = sphi 0, %s236
      %s238 = sphi 0, %s236
      %s239 = sphi 0, %s238
      %s253 = sphi 0, %s239
      %s257 = sphi 0, %s257
      %s259 = sphi 0, %s257
      %s260 = sphi 0, %s259
      %s274 = sphi 0, %s260
      %s278 = sphi 0, %s278
      %s280 = sphi 0, %s278
      %s281 = sphi 0, %s280
      %s295 = sphi 0, %s281
      %s299 = sphi 0, %s299
      %s301 = sphi 0, %s299
      %s302 = sphi 0, %s301
      %s316 = sphi 0, %s302
      %s322 = sphi 0, %s324
      %s325 = sphi 0, %s322
      %s326 = sphi 0, %s325
      %s342 = sphi 0, %s326
      %s348 = sphi 0, %s350
      %s351 = sphi 0, %s348
      %s352 = sphi 0, %s351
      %s368 = sphi 0, %s352
    $region4: #{enc_dec_mha_forward.1} parent=1 // loop_header_branch
      %32 = sbr.rel (%p30) target = $region8
    $region5: #{enc_dec_mha_forward.1} parent=1 // loop_body
      %s34 = ssub.s32 %s29, 1
      %s35 = ssub.s32 %s29, 2
      %s36 = sadd.s32 %s29, 1
      %s37 = ssub.s32 %s29, %s36
      %p38 = scmp.eq.s32.totalorder %s37, 0
      %s40 = sadd.s32 %s39, 1
      %s41 = scalar_select %p38, %s39, %s40
      %p44 = pneg %p38
      %p45 = scmp.eq.s32.totalorder %s29, 7
      %p46 = por %p44, %p45
      %p47 = scmp.ne.s32.totalorder %s39, %s42
      %p48 = scmp.eq.s32.totalorder %s29, 0
      %p49 = por %p47, %p48
      %p50 = scmp.ne.s32.totalorder %s39, %s42
      %p51 = scmp.eq.s32.totalorder %s34, 7
      %p52 = por %p50, %p51
      %p53 = scmp.ne.s32.totalorder %s42, %s43
      %p54 = scmp.eq.s32.totalorder %s34, 0
      %p55 = por %p53, %p54
      %p56 = scmp.ne.s32.totalorder %s42, %s43
      %p57 = scmp.eq.s32.totalorder %s35, 7
      %p58 = por %p56, %p57
      %p60 = scmp.ne.s32.totalorder %s43, %s59
      %p61 = scmp.eq.s32.totalorder %s35, 0
      %p62 = por %p60, %p61
      %s63 = ssub.s32 %s29, %s36
      %p64 = scmp.eq.s32.totalorder %s63, 0
      %s66 = sadd.s32 %s65, 1
      %s67 = scalar_select %p64, %s65, %s66
      %p70 = pneg %p64
      %p71 = scmp.eq.s32.totalorder %s29, 7
      %p72 = por %p70, %p71
      %p73 = scmp.ne.s32.totalorder %s65, %s68
      %p74 = scmp.eq.s32.totalorder %s29, 0
      %p75 = por %p73, %p74
      %p76 = scmp.ne.s32.totalorder %s65, %s68
      %p77 = scmp.eq.s32.totalorder %s34, 7
      %p78 = por %p76, %p77
      %p79 = scmp.ne.s32.totalorder %s68, %s69
      %p80 = scmp.eq.s32.totalorder %s34, 0
      %p81 = por %p79, %p80
      %p82 = scmp.ne.s32.totalorder %s68, %s69
      %p83 = scmp.eq.s32.totalorder %s35, 7
      %p84 = por %p82, %p83
      %p86 = scmp.ne.s32.totalorder %s69, %s85
      %p87 = scmp.eq.s32.totalorder %s35, 0
      %p88 = por %p86, %p87
      %s90 = sadd.s32 %s89, 1
      %p93 = scmp.eq.s32.totalorder %s29, 7
      %p94 = scmp.ne.s32.totalorder %s89, %s91
      %p95 = scmp.eq.s32.totalorder %s29, 0
      %p96 = por %p94, %p95
      %p97 = scmp.ne.s32.totalorder %s89, %s91
      %p98 = scmp.eq.s32.totalorder %s34, 7
      %p99 = por %p97, %p98
      %p100 = scmp.ne.s32.totalorder %s91, %s92
      %p101 = scmp.eq.s32.totalorder %s34, 0
      %p102 = por %p100, %p101
      %p103 = scmp.ne.s32.totalorder %s91, %s92
      %p104 = scmp.eq.s32.totalorder %s35, 7
      %p105 = por %p103, %p104
      %p107 = scmp.ne.s32.totalorder %s92, %s106
      %p108 = scmp.eq.s32.totalorder %s35, 0
      %p109 = por %p107, %p108
      %s111 = sadd.s32 %s110, 1
      %p114 = scmp.eq.s32.totalorder %s29, 7
      %p115 = scmp.ne.s32.totalorder %s110, %s112
      %p116 = scmp.eq.s32.totalorder %s29, 0
      %p117 = por %p115, %p116
      %p118 = scmp.ne.s32.totalorder %s110, %s112
      %p119 = scmp.eq.s32.totalorder %s34, 7
      %p120 = por %p118, %p119
      %p121 = scmp.ne.s32.totalorder %s112, %s113
      %p122 = scmp.eq.s32.totalorder %s34, 0
      %p123 = por %p121, %p122
      %p124 = scmp.ne.s32.totalorder %s112, %s113
      %p125 = scmp.eq.s32.totalorder %s35, 7
      %p126 = por %p124, %p125
      %p128 = scmp.ne.s32.totalorder %s113, %s127
      %p129 = scmp.eq.s32.totalorder %s35, 0
      %p130 = por %p128, %p129
      %s132 = sadd.s32 %s131, 1
      %p135 = scmp.eq.s32.totalorder %s29, 7
      %p136 = scmp.ne.s32.totalorder %s131, %s133
      %p137 = scmp.eq.s32.totalorder %s29, 0
      %p138 = por %p136, %p137
      %p139 = scmp.ne.s32.totalorder %s131, %s133
      %p140 = scmp.eq.s32.totalorder %s34, 7
      %p141 = por %p139, %p140
      %p142 = scmp.ne.s32.totalorder %s133, %s134
      %p143 = scmp.eq.s32.totalorder %s34, 0
      %p144 = por %p142, %p143
      %p145 = scmp.ne.s32.totalorder %s133, %s134
      %p146 = scmp.eq.s32.totalorder %s35, 7
      %p147 = por %p145, %p146
      %p149 = scmp.ne.s32.totalorder %s134, %s148
      %p150 = scmp.eq.s32.totalorder %s35, 0
      %p151 = por %p149, %p150
      %s153 = sadd.s32 %s152, 1
      %p156 = scmp.eq.s32.totalorder %s29, 7
      %p157 = scmp.ne.s32.totalorder %s152, %s154
      %p158 = scmp.eq.s32.totalorder %s29, 0
      %p159 = por %p157, %p158
      %p160 = scmp.ne.s32.totalorder %s152, %s154
      %p161 = scmp.eq.s32.totalorder %s34, 7
      %p162 = por %p160, %p161
      %p163 = scmp.ne.s32.totalorder %s154, %s155
      %p164 = scmp.eq.s32.totalorder %s34, 0
      %p165 = por %p163, %p164
      %p166 = scmp.ne.s32.totalorder %s154, %s155
      %p167 = scmp.eq.s32.totalorder %s35, 7
      %p168 = por %p166, %p167
      %p170 = scmp.ne.s32.totalorder %s155, %s169
      %p171 = scmp.eq.s32.totalorder %s35, 0
      %p172 = por %p170, %p171
      %s174 = sadd.s32 %s173, 1
      %p177 = scmp.eq.s32.totalorder %s29, 7
      %p178 = scmp.ne.s32.totalorder %s173, %s175
      %p179 = scmp.eq.s32.totalorder %s29, 0
      %p180 = por %p178, %p179
      %p181 = scmp.ne.s32.totalorder %s173, %s175
      %p182 = scmp.eq.s32.totalorder %s34, 7
      %p183 = por %p181, %p182
      %p184 = scmp.ne.s32.totalorder %s175, %s176
      %p185 = scmp.eq.s32.totalorder %s34, 0
      %p186 = por %p184, %p185
      %p187 = scmp.ne.s32.totalorder %s175, %s176
      %p188 = scmp.eq.s32.totalorder %s35, 7
      %p189 = por %p187, %p188
      %p191 = scmp.ne.s32.totalorder %s176, %s190
      %p192 = scmp.eq.s32.totalorder %s35, 0
      %p193 = por %p191, %p192
      %s195 = sadd.s32 %s194, 1
      %p198 = scmp.eq.s32.totalorder %s29, 7
      %p199 = scmp.ne.s32.totalorder %s194, %s196
      %p200 = scmp.eq.s32.totalorder %s29, 0
      %p201 = por %p199, %p200
      %p202 = scmp.ne.s32.totalorder %s194, %s196
      %p203 = scmp.eq.s32.totalorder %s34, 7
      %p204 = por %p202, %p203
      %p205 = scmp.ne.s32.totalorder %s196, %s197
      %p206 = scmp.eq.s32.totalorder %s34, 0
      %p207 = por %p205, %p206
      %p208 = scmp.ne.s32.totalorder %s196, %s197
      %p209 = scmp.eq.s32.totalorder %s35, 7
      %p210 = por %p208, %p209
      %p212 = scmp.ne.s32.totalorder %s197, %s211
      %p213 = scmp.eq.s32.totalorder %s35, 0
      %p214 = por %p212, %p213
      %s216 = sadd.s32 %s215, 1
      %p219 = scmp.eq.s32.totalorder %s29, 7
      %p220 = scmp.ne.s32.totalorder %s215, %s217
      %p221 = scmp.eq.s32.totalorder %s29, 0
      %p222 = por %p220, %p221
      %p223 = scmp.ne.s32.totalorder %s215, %s217
      %p224 = scmp.eq.s32.totalorder %s34, 7
      %p225 = por %p223, %p224
      %p226 = scmp.ne.s32.totalorder %s217, %s218
      %p227 = scmp.eq.s32.totalorder %s34, 0
      %p228 = por %p226, %p227
      %p229 = scmp.ne.s32.totalorder %s217, %s218
      %p230 = scmp.eq.s32.totalorder %s35, 7
      %p231 = por %p229, %p230
      %p233 = scmp.ne.s32.totalorder %s218, %s232
      %p234 = scmp.eq.s32.totalorder %s35, 0
      %p235 = por %p233, %p234
      %s237 = sadd.s32 %s236, 1
      %p240 = scmp.eq.s32.totalorder %s29, 7
      %p241 = scmp.ne.s32.totalorder %s236, %s238
      %p242 = scmp.eq.s32.totalorder %s29, 0
      %p243 = por %p241, %p242
      %p244 = scmp.ne.s32.totalorder %s236, %s238
      %p245 = scmp.eq.s32.totalorder %s34, 7
      %p246 = por %p244, %p245
      %p247 = scmp.ne.s32.totalorder %s238, %s239
      %p248 = scmp.eq.s32.totalorder %s34, 0
      %p249 = por %p247, %p248
      %p250 = scmp.ne.s32.totalorder %s238, %s239
      %p251 = scmp.eq.s32.totalorder %s35, 7
      %p252 = por %p250, %p251
      %p254 = scmp.ne.s32.totalorder %s239, %s253
      %p255 = scmp.eq.s32.totalorder %s35, 0
      %p256 = por %p254, %p255
      %s258 = sadd.s32 %s257, 1
      %p261 = scmp.eq.s32.totalorder %s29, 7
      %p262 = scmp.ne.s32.totalorder %s257, %s259
      %p263 = scmp.eq.s32.totalorder %s29, 0
      %p264 = por %p262, %p263
      %p265 = scmp.ne.s32.totalorder %s257, %s259
      %p266 = scmp.eq.s32.totalorder %s34, 7
      %p267 = por %p265, %p266
      %p268 = scmp.ne.s32.totalorder %s259, %s260
      %p269 = scmp.eq.s32.totalorder %s34, 0
      %p270 = por %p268, %p269
      %p271 = scmp.ne.s32.totalorder %s259, %s260
      %p272 = scmp.eq.s32.totalorder %s35, 7
      %p273 = por %p271, %p272
      %p275 = scmp.ne.s32.totalorder %s260, %s274
      %p276 = scmp.eq.s32.totalorder %s35, 0
      %p277 = por %p275, %p276
      %s279 = sadd.s32 %s278, 1
      %p282 = scmp.eq.s32.totalorder %s29, 7
      %p283 = scmp.ne.s32.totalorder %s278, %s280
      %p284 = scmp.eq.s32.totalorder %s29, 0
      %p285 = por %p283, %p284
      %p286 = scmp.ne.s32.totalorder %s278, %s280
      %p287 = scmp.eq.s32.totalorder %s34, 7
      %p288 = por %p286, %p287
      %p289 = scmp.ne.s32.totalorder %s280, %s281
      %p290 = scmp.eq.s32.totalorder %s34, 0
      %p291 = por %p289, %p290
      %p292 = scmp.ne.s32.totalorder %s280, %s281
      %p293 = scmp.eq.s32.totalorder %s35, 7
      %p294 = por %p292, %p293
      %p296 = scmp.ne.s32.totalorder %s281, %s295
      %p297 = scmp.eq.s32.totalorder %s35, 0
      %p298 = por %p296, %p297
      %s300 = sadd.s32 %s299, 1
      %p303 = scmp.eq.s32.totalorder %s29, 7
      %p304 = scmp.ne.s32.totalorder %s299, %s301
      %p305 = scmp.eq.s32.totalorder %s29, 0
      %p306 = por %p304, %p305
      %p307 = scmp.ne.s32.totalorder %s299, %s301
      %p308 = scmp.eq.s32.totalorder %s34, 7
      %p309 = por %p307, %p308
      %p310 = scmp.ne.s32.totalorder %s301, %s302
      %p311 = scmp.eq.s32.totalorder %s34, 0
      %p312 = por %p310, %p311
      %p313 = scmp.ne.s32.totalorder %s301, %s302
      %p314 = scmp.eq.s32.totalorder %s35, 7
      %p315 = por %p313, %p314
      %p317 = scmp.ne.s32.totalorder %s302, %s316
      %p318 = scmp.eq.s32.totalorder %s35, 0
      %p319 = por %p317, %p318
      %s320 = ssub.s32 %s29, %s36
      %p321 = scmp.eq.s32.totalorder %s320, 0
      %s323 = sadd.s32 %s322, 1
      %s324 = scalar_select %p321, %s322, %s323
      %p327 = pneg %p321
      %p328 = scmp.eq.s32.totalorder %s29, 7
      %p329 = por %p327, %p328
      %p330 = scmp.ne.s32.totalorder %s322, %s325
      %p331 = scmp.eq.s32.totalorder %s29, 0
      %p332 = por %p330, %p331
      %p333 = scmp.ne.s32.totalorder %s322, %s325
      %p334 = scmp.eq.s32.totalorder %s34, 7
      %p335 = por %p333, %p334
      %p336 = scmp.ne.s32.totalorder %s325, %s326
      %p337 = scmp.eq.s32.totalorder %s34, 0
      %p338 = por %p336, %p337
      %p339 = scmp.ne.s32.totalorder %s325, %s326
      %p340 = scmp.eq.s32.totalorder %s35, 7
      %p341 = por %p339, %p340
      %p343 = scmp.ne.s32.totalorder %s326, %s342
      %p344 = scmp.eq.s32.totalorder %s35, 0
      %p345 = por %p343, %p344
      %s346 = ssub.s32 %s29, %s36
      %p347 = scmp.eq.s32.totalorder %s346, 0
      %s349 = sadd.s32 %s348, 1
      %s350 = scalar_select %p347, %s348, %s349
      %p353 = pneg %p347
      %p354 = scmp.eq.s32.totalorder %s29, 7
      %p355 = por %p353, %p354
      %p356 = scmp.ne.s32.totalorder %s348, %s351
      %p357 = scmp.eq.s32.totalorder %s29, 0
      %p358 = por %p356, %p357
      %p359 = scmp.ne.s32.totalorder %s348, %s351
      %p360 = scmp.eq.s32.totalorder %s34, 7
      %p361 = por %p359, %p360
      %p362 = scmp.ne.s32.totalorder %s351, %s352
      %p363 = scmp.eq.s32.totalorder %s34, 0
      %p364 = por %p362, %p363
      %p365 = scmp.ne.s32.totalorder %s351, %s352
      %p366 = scmp.eq.s32.totalorder %s35, 7
      %p367 = por %p365, %p366
      %p369 = scmp.ne.s32.totalorder %s352, %s368
      %p370 = scmp.eq.s32.totalorder %s35, 0
      %p371 = por %p369, %p370
      %p372 = scmp.le.s32.totalorder 1, %s29
      %p373 = scmp.lt.s32.totalorder %s29, 9
      %p374 = pnand %p372, %p373
      %p375 = pneg %p374
      // Predicated region
      $region9: #{enc_dec_mha_forward.1} parent=5 // pred_check
        _
      $region10: #{enc_dec_mha_forward.1} parent=5 // pred_check_branch
        %377 = sbr.rel (%p374) target = $region12
      $region11: #{enc_dec_mha_forward.1} parent=5 // pred_region
        %s378 = ssub.s32 %s29, 1
        // Predicated region
        $region13: #{enc_dec_mha_forward.1} parent=11 // pred_check
          %p379 = pneg %p102
        $region14: #{enc_dec_mha_forward.1} parent=11 // pred_check_branch
          %381 = sbr.rel (%p379) target = $region16
        $region15: #{enc_dec_mha_forward.1} parent=11 // pred_region
          _
        $region16: #{enc_dec_mha_forward.1} parent=11 // pred_fallthru
          _
        // Predicated region
        $region17: #{enc_dec_mha_forward.1} parent=11 // pred_check
          %p382 = pneg %p123
        $region18: #{enc_dec_mha_forward.1} parent=11 // pred_check_branch
          %384 = sbr.rel (%p382) target = $region20
        $region19: #{enc_dec_mha_forward.1} parent=11 // pred_region
          %s386 = ssub.s32 512, 512
          %387 = vsyncadd [#allocation6], %s386
          %s388 = sshll.u32 [#allocation5], 4
          %s389 = int_to_ptr.vmem [resolvable:$true] %s388
          %394 = dma.hbm_to_vmem [thread:$0]  %s3, 512, %s389, [#allocation6], 128, 128, 8
        $region20: #{enc_dec_mha_forward.1} parent=11 // pred_fallthru
          _
        // Predicated region
        $region21: #{enc_dec_mha_forward.1} parent=11 // pred_check
          %p395 = pneg %p144
        $region22: #{enc_dec_mha_forward.1} parent=11 // pred_check_branch
          %397 = sbr.rel (%p395) target = $region24
        $region23: #{enc_dec_mha_forward.1} parent=11 // pred_region
          %s399 = ssub.s32 512, 512
          %400 = vsyncadd [#allocation6], %s399
          %s401 = sshll.u32 [#allocation7], 4
          %s402 = int_to_ptr.vmem [resolvable:$true] %s401
          %407 = dma.hbm_to_vmem [thread:$0]  %s4, 512, %s402, [#allocation6], 128, 128, 8
        $region24: #{enc_dec_mha_forward.1} parent=11 // pred_fallthru
          _
        // Predicated region
        $region25: #{enc_dec_mha_forward.1} parent=11 // pred_check
          %p408 = pneg %p165
        $region26: #{enc_dec_mha_forward.1} parent=11 // pred_check_branch
          %410 = sbr.rel (%p408) target = $region28
        $region27: #{enc_dec_mha_forward.1} parent=11 // pred_region
          %s412 = ssub.s32 512, 512
          %413 = vsyncadd [#allocation9], %s412
          %s414 = sshll.u32 [#allocation8], 4
          %s415 = int_to_ptr.vmem [resolvable:$true] %s414
          %420 = dma.hbm_to_vmem [thread:$0]  %s5, 512, %s415, [#allocation9], 128, 128, 8
        $region28: #{enc_dec_mha_forward.1} parent=11 // pred_fallthru
          _
        // Predicated region
        $region29: #{enc_dec_mha_forward.1} parent=11 // pred_check
          %p421 = pneg %p186
        $region30: #{enc_dec_mha_forward.1} parent=11 // pred_check_branch
          %423 = sbr.rel (%p421) target = $region32
        $region31: #{enc_dec_mha_forward.1} parent=11 // pred_region
          _
        $region32: #{enc_dec_mha_forward.1} parent=11 // pred_fallthru
          _
        // Predicated region
        $region33: #{enc_dec_mha_forward.1} parent=11 // pred_check
          %p424 = pneg %p207
        $region34: #{enc_dec_mha_forward.1} parent=11 // pred_check_branch
          %426 = sbr.rel (%p424) target = $region36
        $region35: #{enc_dec_mha_forward.1} parent=11 // pred_region
          _
        $region36: #{enc_dec_mha_forward.1} parent=11 // pred_fallthru
          _
        // Predicated region
        $region37: #{enc_dec_mha_forward.1} parent=11 // pred_check
          %p427 = pneg %p228
        $region38: #{enc_dec_mha_forward.1} parent=11 // pred_check_branch
          %429 = sbr.rel (%p427) target = $region40
        $region39: #{enc_dec_mha_forward.1} parent=11 // pred_region
          _
        $region40: #{enc_dec_mha_forward.1} parent=11 // pred_fallthru
          _
        // Predicated region
        $region41: #{enc_dec_mha_forward.1} parent=11 // pred_check
          %p430 = pneg %p249
        $region42: #{enc_dec_mha_forward.1} parent=11 // pred_check_branch
          %432 = sbr.rel (%p430) target = $region44
        $region43: #{enc_dec_mha_forward.1} parent=11 // pred_region
          _
        $region44: #{enc_dec_mha_forward.1} parent=11 // pred_fallthru
          _
        // Predicated region
        $region45: #{enc_dec_mha_forward.1} parent=11 // pred_check
          %p433 = pneg %p270
        $region46: #{enc_dec_mha_forward.1} parent=11 // pred_check_branch
          %435 = sbr.rel (%p433) target = $region48
        $region47: #{enc_dec_mha_forward.1} parent=11 // pred_region
          _
        $region48: #{enc_dec_mha_forward.1} parent=11 // pred_fallthru
          _
        // Predicated region
        $region49: #{enc_dec_mha_forward.1} parent=11 // pred_check
          %p436 = pneg %p291
        $region50: #{enc_dec_mha_forward.1} parent=11 // pred_check_branch
          %438 = sbr.rel (%p436) target = $region52
        $region51: #{enc_dec_mha_forward.1} parent=11 // pred_region
          _
        $region52: #{enc_dec_mha_forward.1} parent=11 // pred_fallthru
          _
        // Predicated region
        $region53: #{enc_dec_mha_forward.1} parent=11 // pred_check
          %p439 = pneg %p312
        $region54: #{enc_dec_mha_forward.1} parent=11 // pred_check_branch
          %441 = sbr.rel (%p439) target = $region56
        $region55: #{enc_dec_mha_forward.1} parent=11 // pred_region
          _
        $region56: #{enc_dec_mha_forward.1} parent=11 // pred_fallthru
          _
      $region12: #{enc_dec_mha_forward.1} parent=5 // pred_fallthru
        _
      %p442 = scmp.lt.s32.totalorder %s29, 8
      // Predicated region
      $region57: #{enc_dec_mha_forward.1} parent=5 // pred_check
        %p443 = pneg %p442
      $region58: #{enc_dec_mha_forward.1} parent=5 // pred_check_branch
        %445 = sbr.rel (%p443) target = $region60
      $region59: #{enc_dec_mha_forward.1} parent=5 // pred_region
        // Predicated region
        $region61: #{enc_dec_mha_forward.1} parent=59 // pred_check
          %p446 = pneg %p49
        $region62: #{enc_dec_mha_forward.1} parent=59 // pred_check_branch
          %448 = sbr.rel (%p446) target = $region64
        $region63: #{enc_dec_mha_forward.1} parent=59 // pred_region
          %s449 = sand.u32 %s39, 1
          %s450 = scalar_lea.sflag [#allocation3], %s449
          %s451 = sand.u32 %s39, 1
          %s452 = smul.addr %s451, 2
          %s453 = scalar_lea.vmem [#allocation2], %s452
          %s455 = ssub.s32 32, 32
          %456 = vsyncadd %s450, %s455
          %s457 = smul.addr %s29, 32
          %s458 = scalar_lea.hbm %s0, %s457
          %s460 = sshll.u32 %s453, 4
          %s461 = int_to_ptr.vmem [resolvable:$true] %s460
          %463 = dma.hbm_to_vmem [thread:$0]  %s458, 32, %s461, %s450
        $region64: #{enc_dec_mha_forward.1} parent=59 // pred_fallthru
          _
        // Predicated region
        $region65: #{enc_dec_mha_forward.1} parent=59 // pred_check
          %p464 = pneg %p75
        $region66: #{enc_dec_mha_forward.1} parent=59 // pred_check_branch
          %466 = sbr.rel (%p464) target = $region68
        $region67: #{enc_dec_mha_forward.1} parent=59 // pred_region
          %p467 = scmp.lt.s32.totalorder %s29, 7
          %s468 = scalar_select %p467, %s29, 7
          %s469 = smul.addr %s468, 2
          %s470 = smul.addr %s469, 8
          %s471 = scalar_lea.vmem %s1, %s470
        $region68: #{enc_dec_mha_forward.1} parent=59 // pred_fallthru
          _
      $region60: #{enc_dec_mha_forward.1} parent=5 // pred_fallthru
        _
      %p472 = scmp.le.s32.totalorder 1, %s29
      %p473 = scmp.lt.s32.totalorder %s29, 9
      %p474 = pnand %p472, %p473
      %p475 = pneg %p474
      // Predicated region
      $region69: #{enc_dec_mha_forward.1} parent=5 // pred_check
        _
      $region70: #{enc_dec_mha_forward.1} parent=5 // pred_check_branch
        %477 = sbr.rel (%p474) target = $region72
      $region71: #{enc_dec_mha_forward.1} parent=5 // pred_region
        %s478 = ssub.s32 %s29, 1
        %s479 = sand.u32 %s42, 1
        %s480 = scalar_lea.sflag [#allocation3], %s479
        %s481 = sand.u32 %s42, 1
        %s482 = smul.addr %s481, 2
        %s483 = scalar_lea.vmem [#allocation2], %s482
        // Predicated region
        $region73: #{enc_dec_mha_forward.1} parent=71 // pred_check
          %p484 = pneg %p55
        $region74: #{enc_dec_mha_forward.1} parent=71 // pred_check_branch
          %486 = sbr.rel (%p484) target = $region76
        $region75: #{enc_dec_mha_forward.1} parent=71 // pred_region
          %487 = dma.done %s480, 32
        $region76: #{enc_dec_mha_forward.1} parent=71 // pred_fallthru
          _
        // Predicated region
        $region77: #{enc_dec_mha_forward.1} parent=71 // pred_check
          %p488 = pneg %p123
        $region78: #{enc_dec_mha_forward.1} parent=71 // pred_check_branch
          %490 = sbr.rel (%p488) target = $region80
        $region79: #{enc_dec_mha_forward.1} parent=71 // pred_region
          %491 = dma.done [#allocation6], 512
        $region80: #{enc_dec_mha_forward.1} parent=71 // pred_fallthru
          _
        // Predicated region
        $region81: #{enc_dec_mha_forward.1} parent=71 // pred_check
          %p492 = pneg %p144
        $region82: #{enc_dec_mha_forward.1} parent=71 // pred_check_branch
          %494 = sbr.rel (%p492) target = $region84
        $region83: #{enc_dec_mha_forward.1} parent=71 // pred_region
          %495 = dma.done [#allocation6], 512
        $region84: #{enc_dec_mha_forward.1} parent=71 // pred_fallthru
          _
        // Predicated region
        $region85: #{enc_dec_mha_forward.1} parent=71 // pred_check
          %p496 = pneg %p165
        $region86: #{enc_dec_mha_forward.1} parent=71 // pred_check_branch
          %498 = sbr.rel (%p496) target = $region88
        $region87: #{enc_dec_mha_forward.1} parent=71 // pred_region
          %499 = dma.done [#allocation9], 512
        $region88: #{enc_dec_mha_forward.1} parent=71 // pred_fallthru
          _
        %s500 = sand.u32 %s42, 1
        %s501 = scalar_lea.sflag [#allocation3], %s500
        %s502 = sand.u32 %s42, 1
        %s503 = smul.addr %s502, 2
        %s504 = scalar_lea.vmem [#allocation2], %s503
        %p505 = pneg %p55
        %p506 = pneg %p52
        %p507 = scmp.lt.s32.totalorder %s34, 7
        %s508 = scalar_select %p507, %s34, 7
        %s509 = smul.addr %s508, 2
        %s510 = smul.addr %s509, 8
        %s511 = scalar_lea.vmem %s1, %s510
        %p512 = pneg %p81
        %p513 = pneg %p78
        %p514 = pneg %p102
        %p515 = pneg %p99
        %p516 = pneg %p123
        %p517 = pneg %p120
        %p518 = pneg %p144
        %p519 = pneg %p141
        %p520 = pneg %p165
        %p521 = pneg %p162
        %p522 = pneg %p186
        %p523 = pneg %p183
        %p524 = pneg %p207
        %p525 = pneg %p204
        %p526 = pneg %p228
        %p527 = pneg %p225
        %p528 = pneg %p249
        %p529 = pneg %p246
        %p530 = pneg %p270
        %p531 = pneg %p267
        %p532 = pneg %p291
        %p533 = pneg %p288
        %p534 = pneg %p312
        %p535 = pneg %p309
        %p536 = pneg %p338
        %p537 = pneg %p335
        %s538 = sand.u32 %s325, 1
        %s539 = scalar_lea.sflag [#allocation4], %s538
        %s540 = sand.u32 %s325, 1
        %s541 = smul.addr %s540, 2
        %s542 = scalar_lea.vmem [#allocation10], %s541
        %p543 = pneg %p364
        %p544 = pneg %p361
        %p545 = scmp.lt.s32.totalorder %s34, 7
        %s546 = scalar_select %p545, %s34, 7
        %s547 = smul.addr %s546, 2
        %s548 = scalar_lea.vmem %s14, %s547
        %p549 = scmp.lt.s32.totalorder %s34, 7
        %s550 = scalar_select %p549, %s34, 7
        %s551 = smul.addr %s550, 2
        %s552 = smul.addr %s551, 8
        %s553 = scalar_lea.vmem %s1, %s552
        %p554 = scmp.lt.s32.totalorder %s34, 7
        %s555 = scalar_select %p554, %s34, 7
        %s556 = smul.addr %s555, 2
        %s557 = scalar_lea.vmem %s14, %s556
        %v558 = vld [vmem:[%s483] sm:$0x3]
        %v559 = vld [vmem:[%s553] sm:$0xff]
        %v560 = vld [vmem:[%s553 + $0x8] sm:$0xff]
        %v561 = vld [vmem:[%s2] sm:$0xff]
        %v562 = vld [vmem:[%s2 + $0x8] sm:$0xff]
        %v563 = vld [vmem:[%s2 + $0x10] sm:$0xff]
        %v564 = vld [vmem:[%s2 + $0x18] sm:$0xff]
        %v565 = vld [vmem:[%s6] sm:$0x1]
        %v567 = vlaneseq
        %v568 = vshrl.u32 %v567, 7
        %v569 = vsub.s32 0, %v568
        %v570 = vrot.slane %v565, %v569
        %vm572 = vcmask 261120
        %v574 = vsel %vm572, %v558, 0
        %v577 = vsel %vm572, %v561, 0
        %v580 = vsel %vm572, %v562, 0
        %v583 = vsel %vm572, %v563, 0
        %v586 = vsel %vm572, %v564, 0
        %588 = vmatprep.subr.mxu0 0.0
        %589 = vmatpush1.xpose.msra.mxu0 %v577
        %590 = vmatprep.subr.mxu0 0.0
        %591 = vmatpush1.xpose.msra.mxu0 %v580
        %592 = vmatprep.subr.mxu0 0.0
        %593 = vmatpush1.xpose.msra.mxu0 %v583
        %594 = vmatprep.subr.mxu0 0.0
        %595 = vmatpush1.xpose.msra.mxu0 %v586
        %596 = vmatprep.subr.mxu0 0.0
        %597 = vmatpush1.xpose.msra.mxu0 0.0
        %598 = vmatprep.subr.mxu0 0.0
        %599 = vmatpush1.xpose.msra.mxu0 0.0
        %600 = vmatprep.subr.mxu0 0.0
        %601 = vmatpush1.xpose.msra.mxu0 0.0
        %602 = vmatprep.subr.mxu0 0.0
        %603 = vmatpush1.xpose.msra.mxu0 0.0
        %604 = vmatprep.subr.mxu0 0.0
        %605 = vmatpush1.xpose.msra.mxu0 0.0
        %606 = vmatprep.subr.mxu0 0.0
        %607 = vmatpush1.xpose.msra.mxu0 0.0
        %608 = vmatprep.subr.mxu0 0.0
        %609 = vmatpush1.xpose.msra.mxu0 0.0
        %610 = vmatprep.subr.mxu0 0.0
        %611 = vmatpush1.xpose.msra.mxu0 0.0
        %612 = vmatprep.subr.mxu0 0.0
        %613 = vmatpush1.xpose.msra.mxu0 0.0
        %614 = vmatprep.subr.mxu0 0.0
        %615 = vmatpush1.xpose.msra.mxu0 0.0
        %616 = vmatprep.subr.mxu0 0.0
        %617 = vmatpush1.xpose.msra.mxu0 0.0
        %618 = vmatprep.subr.mxu0 0.0
        %619 = vmatpush1.xpose.msra.mxu0 0.0
        %620 = vmatprep.subr.mxu0 0.0
        %621 = vmatpush1.xpose.msra.mxu0 0.0
        %622 = vmatprep.subr.mxu0 0.0
        %623 = vmatpush1.xpose.msra.mxu0 0.0
        %624 = vmatprep.subr.mxu0 0.0
        %625 = vmatpush1.xpose.msra.mxu0 0.0
        %626 = vmatprep.subr.mxu0 0.0
        %627 = vmatpush1.xpose.msra.mxu0 0.0
        %628 = vmatprep.subr.mxu0 0.0
        %629 = vmatpush1.xpose.msra.mxu0 0.0
        %630 = vmatprep.subr.mxu0 0.0
        %631 = vmatpush1.xpose.msra.mxu0 0.0
        %632 = vmatprep.subr.mxu0 0.0
        %633 = vmatpush1.xpose.msra.mxu0 0.0
        %634 = vmatprep.subr.mxu0 0.0
        %635 = vmatpush1.xpose.msra.mxu0 0.0
        %636 = vmatprep.subr.mxu0 0.0
        %637 = vmatpush1.xpose.msra.mxu0 0.0
        %638 = vmatprep.subr.mxu0 0.0
        %639 = vmatpush1.xpose.msra.mxu0 0.0
        %640 = vmatprep.subr.mxu0 0.0
        %641 = vmatpush1.xpose.msra.mxu0 0.0
        %642 = vmatprep.subr.mxu0 0.0
        %643 = vmatpush1.xpose.msra.mxu0 0.0
        %644 = vmatprep.subr.mxu0 0.0
        %645 = vmatpush1.xpose.msra.mxu0 0.0
        %646 = vmatprep.subr.mxu0 0.0
        %647 = vmatpush1.xpose.msra.mxu0 0.0
        %648 = vmatprep.subr.mxu0 0.0
        %649 = vmatpush1.xpose.msra.mxu0 0.0
        %650 = vmatprep.subr.mxu0 0.0
        %651 = vmatpush1.xpose.msra.mxu0 0.0
        %652 = vmatprep.mubr.f32.mxu0 0.0
        %653 = vmatmul.mubr.f32.gmra.mrb[0].mxu0 %v574
        %v654 = vpop.f32.mrb[0].mxu0
        %v655 = vadd.f32 %v570, %v654
        %v656 = vpop.f32.mrb[0].mxu0
        %657 = vdwg.mxu0
        %v658 = vmul.f32 %v655, 0.35355338
        %v659 = vld [vmem:[#allocation5] sm:$0xff]
        %v660 = vld [vmem:[#allocation5 + $0x8] sm:$0xff]
        %v661 = vld [vmem:[#allocation5 + $0x10] sm:$0xff]
        %v662 = vld [vmem:[#allocation5 + $0x18] sm:$0xff]
        %v663 = vld [vmem:[%s7] sm:$0x1]
        %v665 = vlaneseq
        %v666 = vshrl.u32 %v665, 7
        %v667 = vsub.s32 0, %v666
        %v668 = vrot.slane %v663, %v667
        %v671 = vsel %vm572, %v559, 0
        %v674 = vsel %vm572, %v560, 0
        %v677 = vsel %vm572, %v659, 0
        %v680 = vsel %vm572, %v660, 0
        %v683 = vsel %vm572, %v661, 0
        %v686 = vsel %vm572, %v662, 0
        %688 = vmatprep.subr.mxu0 0.0
        %689 = vmatpush1.xpose.msra.mxu0 %v677
        %690 = vmatprep.subr.mxu0 0.0
        %691 = vmatpush1.xpose.msra.mxu0 %v680
        %692 = vmatprep.subr.mxu0 0.0
        %693 = vmatpush1.xpose.msra.mxu0 %v683
        %694 = vmatprep.subr.mxu0 0.0
        %695 = vmatpush1.xpose.msra.mxu0 %v686
        %696 = vmatprep.subr.mxu0 0.0
        %697 = vmatpush1.xpose.msra.mxu0 0.0
        %698 = vmatprep.subr.mxu0 0.0
        %699 = vmatpush1.xpose.msra.mxu0 0.0
        %700 = vmatprep.subr.mxu0 0.0
        %701 = vmatpush1.xpose.msra.mxu0 0.0
        %702 = vmatprep.subr.mxu0 0.0
        %703 = vmatpush1.xpose.msra.mxu0 0.0
        %704 = vmatprep.subr.mxu0 0.0
        %705 = vmatpush1.xpose.msra.mxu0 0.0
        %706 = vmatprep.subr.mxu0 0.0
        %707 = vmatpush1.xpose.msra.mxu0 0.0
        %708 = vmatprep.subr.mxu0 0.0
        %709 = vmatpush1.xpose.msra.mxu0 0.0
        %710 = vmatprep.subr.mxu0 0.0
        %711 = vmatpush1.xpose.msra.mxu0 0.0
        %712 = vmatprep.subr.mxu0 0.0
        %713 = vmatpush1.xpose.msra.mxu0 0.0
        %714 = vmatprep.subr.mxu0 0.0
        %715 = vmatpush1.xpose.msra.mxu0 0.0
        %716 = vmatprep.subr.mxu0 0.0
        %717 = vmatpush1.xpose.msra.mxu0 0.0
        %718 = vmatprep.subr.mxu0 0.0
        %719 = vmatpush1.xpose.msra.mxu0 0.0
        %720 = vmatprep.subr.mxu0 0.0
        %721 = vmatpush1.xpose.msra.mxu0 0.0
        %722 = vmatprep.subr.mxu0 0.0
        %723 = vmatpush1.xpose.msra.mxu0 0.0
        %724 = vmatprep.subr.mxu0 0.0
        %725 = vmatpush1.xpose.msra.mxu0 0.0
        %726 = vmatprep.subr.mxu0 0.0
        %727 = vmatpush1.xpose.msra.mxu0 0.0
        %728 = vmatprep.subr.mxu0 0.0
        %729 = vmatpush1.xpose.msra.mxu0 0.0
        %730 = vmatprep.subr.mxu0 0.0
        %731 = vmatpush1.xpose.msra.mxu0 0.0
        %732 = vmatprep.subr.mxu0 0.0
        %733 = vmatpush1.xpose.msra.mxu0 0.0
        %734 = vmatprep.subr.mxu0 0.0
        %735 = vmatpush1.xpose.msra.mxu0 0.0
        %736 = vmatprep.subr.mxu0 0.0
        %737 = vmatpush1.xpose.msra.mxu0 0.0
        %738 = vmatprep.subr.mxu0 0.0
        %739 = vmatpush1.xpose.msra.mxu0 0.0
        %740 = vmatprep.subr.mxu0 0.0
        %741 = vmatpush1.xpose.msra.mxu0 0.0
        %742 = vmatprep.subr.mxu0 0.0
        %743 = vmatpush1.xpose.msra.mxu0 0.0
        %744 = vmatprep.subr.mxu0 0.0
        %745 = vmatpush1.xpose.msra.mxu0 0.0
        %746 = vmatprep.subr.mxu0 0.0
        %747 = vmatpush1.xpose.msra.mxu0 0.0
        %748 = vmatprep.subr.mxu0 0.0
        %749 = vmatpush1.xpose.msra.mxu0 0.0
        %750 = vmatprep.subr.mxu0 0.0
        %751 = vmatpush1.xpose.msra.mxu0 0.0
        %752 = vmatprep.mubr.f32.mxu0 0.0
        %753 = vmatmul.mubr.f32.gmra.mrb[0].mxu0 %v671
        %v754 = vpop.f32.mrb[0].mxu0
        %v755 = vadd.f32 %v668, %v754
        %v756 = vpop.f32.mrb[0].mxu0
        %757 = vmatprep.mubr.f32.mxu0 0.0
        %758 = vmatmul.mubr.f32.gmra.mrb[0].mxu0 %v674
        %v759 = vpop.f32.mrb[0].mxu0
        %v760 = vadd.f32 %v668, %v759
        %v761 = vpop.f32.mrb[0].mxu0
        %762 = vdwg.mxu0
        %v763 = vld [vmem:[#allocation7] sm:$0xff]
        %v764 = vld [vmem:[#allocation7 + $0x8] sm:$0xff]
        %v765 = vld [vmem:[#allocation7 + $0x10] sm:$0xff]
        %v766 = vld [vmem:[#allocation7 + $0x18] sm:$0xff]
        %v767 = vld [vmem:[%s8] sm:$0x1]
        %v769 = vlaneseq
        %v770 = vshrl.u32 %v769, 7
        %v771 = vsub.s32 0, %v770
        %v772 = vrot.slane %v767, %v771
        %v775 = vsel %vm572, %v763, 0
        %v778 = vsel %vm572, %v764, 0
        %v781 = vsel %vm572, %v765, 0
        %v784 = vsel %vm572, %v766, 0
        %786 = vmatprep.subr.mxu0 0.0
        %787 = vmatpush1.xpose.msra.mxu0 %v775
        %788 = vmatprep.subr.mxu0 0.0
        %789 = vmatpush1.xpose.msra.mxu0 %v778
        %790 = vmatprep.subr.mxu0 0.0
        %791 = vmatpush1.xpose.msra.mxu0 %v781
        %792 = vmatprep.subr.mxu0 0.0
        %793 = vmatpush1.xpose.msra.mxu0 %v784
        %794 = vmatprep.subr.mxu0 0.0
        %795 = vmatpush1.xpose.msra.mxu0 0.0
        %796 = vmatprep.subr.mxu0 0.0
        %797 = vmatpush1.xpose.msra.mxu0 0.0
        %798 = vmatprep.subr.mxu0 0.0
        %799 = vmatpush1.xpose.msra.mxu0 0.0
        %800 = vmatprep.subr.mxu0 0.0
        %801 = vmatpush1.xpose.msra.mxu0 0.0
        %802 = vmatprep.subr.mxu0 0.0
        %803 = vmatpush1.xpose.msra.mxu0 0.0
        %804 = vmatprep.subr.mxu0 0.0
        %805 = vmatpush1.xpose.msra.mxu0 0.0
        %806 = vmatprep.subr.mxu0 0.0
        %807 = vmatpush1.xpose.msra.mxu0 0.0
        %808 = vmatprep.subr.mxu0 0.0
        %809 = vmatpush1.xpose.msra.mxu0 0.0
        %810 = vmatprep.subr.mxu0 0.0
        %811 = vmatpush1.xpose.msra.mxu0 0.0
        %812 = vmatprep.subr.mxu0 0.0
        %813 = vmatpush1.xpose.msra.mxu0 0.0
        %814 = vmatprep.subr.mxu0 0.0
        %815 = vmatpush1.xpose.msra.mxu0 0.0
        %816 = vmatprep.subr.mxu0 0.0
        %817 = vmatpush1.xpose.msra.mxu0 0.0
        %818 = vmatprep.subr.mxu0 0.0
        %819 = vmatpush1.xpose.msra.mxu0 0.0
        %820 = vmatprep.subr.mxu0 0.0
        %821 = vmatpush1.xpose.msra.mxu0 0.0
        %822 = vmatprep.subr.mxu0 0.0
        %823 = vmatpush1.xpose.msra.mxu0 0.0
        %824 = vmatprep.subr.mxu0 0.0
        %825 = vmatpush1.xpose.msra.mxu0 0.0
        %826 = vmatprep.subr.mxu0 0.0
        %827 = vmatpush1.xpose.msra.mxu0 0.0
        %828 = vmatprep.subr.mxu0 0.0
        %829 = vmatpush1.xpose.msra.mxu0 0.0
        %830 = vmatprep.subr.mxu0 0.0
        %831 = vmatpush1.xpose.msra.mxu0 0.0
        %832 = vmatprep.subr.mxu0 0.0
        %833 = vmatpush1.xpose.msra.mxu0 0.0
        %834 = vmatprep.subr.mxu0 0.0
        %835 = vmatpush1.xpose.msra.mxu0 0.0
        %836 = vmatprep.subr.mxu0 0.0
        %837 = vmatpush1.xpose.msra.mxu0 0.0
        %838 = vmatprep.subr.mxu0 0.0
        %839 = vmatpush1.xpose.msra.mxu0 0.0
        %840 = vmatprep.subr.mxu0 0.0
        %841 = vmatpush1.xpose.msra.mxu0 0.0
        %842 = vmatprep.subr.mxu0 0.0
        %843 = vmatpush1.xpose.msra.mxu0 0.0
        %844 = vmatprep.subr.mxu0 0.0
        %845 = vmatpush1.xpose.msra.mxu0 0.0
        %846 = vmatprep.subr.mxu0 0.0
        %847 = vmatpush1.xpose.msra.mxu0 0.0
        %848 = vmatprep.subr.mxu0 0.0
        %849 = vmatpush1.xpose.msra.mxu0 0.0
        %850 = vmatprep.mubr.f32.mxu0 0.0
        %851 = vmatmul.mubr.f32.gmra.mrb[0].mxu0 %v671
        %v852 = vpop.f32.mrb[0].mxu0
        %v853 = vadd.f32 %v772, %v852
        %v854 = vpop.f32.mrb[0].mxu0
        %855 = vmatprep.mubr.f32.mxu0 0.0
        %856 = vmatmul.mubr.f32.gmra.mrb[0].mxu0 %v674
        %v857 = vpop.f32.mrb[0].mxu0
        %v858 = vadd.f32 %v772, %v857
        %v859 = vpop.f32.mrb[0].mxu0
        %860 = vdwg.mxu0
        %v861 = vld [vmem:[%s11] sm:$0xff]
        %v862 = vld [vmem:[%s11 + $0x8] sm:$0xff]
        %v863 = vld [vmem:[%s10] sm:$0xff]
        %v864 = vld [vmem:[%s10 + $0x8] sm:$0xff]
        %v865 = vld [vmem:[%s10 + $0x10] sm:$0xff]
        %v866 = vld [vmem:[%s10 + $0x18] sm:$0xff]
        %v867 = vld [vmem:[%s12] sm:$0xff]
        %v868 = vld [vmem:[%s12 + $0x8] sm:$0xff]
        %vm869 = vcmask 15360
        %v871 = vsel %vm869, %v861, 0
        %v874 = vsel %vm869, %v862, 0
        %vm876 = vcmask 1041408
        %v878 = vsel %vm876, %v658, 0
        %880 = vmatprep.subr.mxu0 0.0
        %881 = vmatpush1.msra.mxu0 %v878
        %882 = vmatprep.subr.mxu0 0.0
        %883 = vmatpush1.msra.mxu0 0.0
        %884 = vmatprep.subr.mxu0 0.0
        %885 = vmatpush1.msra.mxu0 0.0
        %886 = vmatprep.subr.mxu0 0.0
        %887 = vmatpush1.msra.mxu0 0.0
        %888 = vmatprep.subr.mxu0 0.0
        %889 = vmatpush1.msra.mxu0 0.0
        %890 = vmatprep.subr.mxu0 0.0
        %891 = vmatpush1.msra.mxu0 0.0
        %892 = vmatprep.subr.mxu0 0.0
        %893 = vmatpush1.msra.mxu0 0.0
        %894 = vmatprep.subr.mxu0 0.0
        %895 = vmatpush1.msra.mxu0 0.0
        %896 = vmatprep.subr.mxu0 0.0
        %897 = vmatpush1.msra.mxu0 0.0
        %898 = vmatprep.subr.mxu0 0.0
        %899 = vmatpush1.msra.mxu0 0.0
        %900 = vmatprep.subr.mxu0 0.0
        %901 = vmatpush1.msra.mxu0 0.0
        %902 = vmatprep.subr.mxu0 0.0
        %903 = vmatpush1.msra.mxu0 0.0
        %904 = vmatprep.subr.mxu0 0.0
        %905 = vmatpush1.msra.mxu0 0.0
        %906 = vmatprep.subr.mxu0 0.0
        %907 = vmatpush1.msra.mxu0 0.0
        %908 = vmatprep.subr.mxu0 0.0
        %909 = vmatpush1.msra.mxu0 0.0
        %910 = vmatprep.subr.mxu0 0.0
        %911 = vmatpush1.msra.mxu0 0.0
        %912 = vmatprep.subr.mxu0 0.0
        %913 = vmatpush1.msra.mxu0 0.0
        %914 = vmatprep.subr.mxu0 0.0
        %915 = vmatpush1.msra.mxu0 0.0
        %916 = vmatprep.subr.mxu0 0.0
        %917 = vmatpush1.msra.mxu0 0.0
        %918 = vmatprep.subr.mxu0 0.0
        %919 = vmatpush1.msra.mxu0 0.0
        %920 = vmatprep.subr.mxu0 0.0
        %921 = vmatpush1.msra.mxu0 0.0
        %922 = vmatprep.subr.mxu0 0.0
        %923 = vmatpush1.msra.mxu0 0.0
        %924 = vmatprep.subr.mxu0 0.0
        %925 = vmatpush1.msra.mxu0 0.0
        %926 = vmatprep.subr.mxu0 0.0
        %927 = vmatpush1.msra.mxu0 0.0
        %928 = vmatprep.subr.mxu0 0.0
        %929 = vmatpush1.msra.mxu0 0.0
        %930 = vmatprep.subr.mxu0 0.0
        %931 = vmatpush1.msra.mxu0 0.0
        %932 = vmatprep.subr.mxu0 0.0
        %933 = vmatpush1.msra.mxu0 0.0
        %934 = vmatprep.subr.mxu0 0.0
        %935 = vmatpush1.msra.mxu0 0.0
        %936 = vmatprep.subr.mxu0 0.0
        %937 = vmatpush1.msra.mxu0 0.0
        %938 = vmatprep.subr.mxu0 0.0
        %939 = vmatpush1.msra.mxu0 0.0
        %940 = vmatprep.subr.mxu0 0.0
        %941 = vmatpush1.msra.mxu0 0.0
        %942 = vmatprep.subr.mxu0 0.0
        %943 = vmatpush1.msra.mxu0 0.0
        %944 = vmatprep.mubr.f32.mxu0 0.0
        %945 = vmatmul.mubr.f32.gmra.mrb[0].mxu0 %v871
        %v946 = vpop.f32.mrb[0].mxu0
        %v947 = vadd.f32 0.0, %v946
        %v948 = vpop.f32.mrb[0].mxu0
        %949 = vmatprep.mubr.f32.mxu0 0.0
        %950 = vmatmul.mubr.f32.gmra.mrb[0].mxu0 %v874
        %v951 = vpop.f32.mrb[0].mxu0
        %v952 = vadd.f32 0.0, %v951
        %v953 = vpop.f32.mrb[0].mxu0
        %954 = vdwg.mxu0
        %v955 = vmul.f32 %v947, %v755
        %v956 = vmul.f32 %v952, %v760
        %v958 = vsel %vm572, %v955, 0
        %v961 = vsel %vm572, %v956, 0
        %963 = vmatprep.subr.mxu0 0.0
        %964 = vmatpush1.msra.mxu0 %v863
        %965 = vmatprep.subr.mxu0 0.0
        %966 = vmatpush1.msra.mxu0 %v864
        %967 = vmatprep.subr.mxu0 0.0
        %968 = vmatpush1.msra.mxu0 %v865
        %969 = vmatprep.subr.mxu0 0.0
        %970 = vmatpush1.msra.mxu0 %v866
        %971 = vmatprep.subr.mxu0 0.0
        %972 = vmatpush1.msra.mxu0 0.0
        %973 = vmatprep.subr.mxu0 0.0
        %974 = vmatpush1.msra.mxu0 0.0
        %975 = vmatprep.subr.mxu0 0.0
        %976 = vmatpush1.msra.mxu0 0.0
        %977 = vmatprep.subr.mxu0 0.0
        %978 = vmatpush1.msra.mxu0 0.0
        %979 = vmatprep.subr.mxu0 0.0
        %980 = vmatpush1.msra.mxu0 0.0
        %981 = vmatprep.subr.mxu0 0.0
        %982 = vmatpush1.msra.mxu0 0.0
        %983 = vmatprep.subr.mxu0 0.0
        %984 = vmatpush1.msra.mxu0 0.0
        %985 = vmatprep.subr.mxu0 0.0
        %986 = vmatpush1.msra.mxu0 0.0
        %987 = vmatprep.subr.mxu0 0.0
        %988 = vmatpush1.msra.mxu0 0.0
        %989 = vmatprep.subr.mxu0 0.0
        %990 = vmatpush1.msra.mxu0 0.0
        %991 = vmatprep.subr.mxu0 0.0
        %992 = vmatpush1.msra.mxu0 0.0
        %993 = vmatprep.subr.mxu0 0.0
        %994 = vmatpush1.msra.mxu0 0.0
        %995 = vmatprep.subr.mxu0 0.0
        %996 = vmatpush1.msra.mxu0 0.0
        %997 = vmatprep.subr.mxu0 0.0
        %998 = vmatpush1.msra.mxu0 0.0
        %999 = vmatprep.subr.mxu0 0.0
        %1000 = vmatpush1.msra.mxu0 0.0
        %1001 = vmatprep.subr.mxu0 0.0
        %1002 = vmatpush1.msra.mxu0 0.0
        %1003 = vmatprep.subr.mxu0 0.0
        %1004 = vmatpush1.msra.mxu0 0.0
        %1005 = vmatprep.subr.mxu0 0.0
        %1006 = vmatpush1.msra.mxu0 0.0
        %1007 = vmatprep.subr.mxu0 0.0
        %1008 = vmatpush1.msra.mxu0 0.0
        %1009 = vmatprep.subr.mxu0 0.0
        %1010 = vmatpush1.msra.mxu0 0.0
        %1011 = vmatprep.subr.mxu0 0.0
        %1012 = vmatpush1.msra.mxu0 0.0
        %1013 = vmatprep.subr.mxu0 0.0
        %1014 = vmatpush1.msra.mxu0 0.0
        %1015 = vmatprep.subr.mxu0 0.0
        %1016 = vmatpush1.msra.mxu0 0.0
        %1017 = vmatprep.subr.mxu0 0.0
        %1018 = vmatpush1.msra.mxu0 0.0
        %1019 = vmatprep.subr.mxu0 0.0
        %1020 = vmatpush1.msra.mxu0 0.0
        %1021 = vmatprep.subr.mxu0 0.0
        %1022 = vmatpush1.msra.mxu0 0.0
        %1023 = vmatprep.subr.mxu0 0.0
        %1024 = vmatpush1.msra.mxu0 0.0
        %1025 = vmatprep.subr.mxu0 0.0
        %1026 = vmatpush1.msra.mxu0 0.0
        %1027 = vmatprep.mubr.f32.mxu0 0.0
        %1028 = vmatmul.mubr.f32.gmra.mrb[0].mxu0 %v958
        %v1029 = vpop.f32.mrb[0].mxu0
        %v1030 = vadd.f32 0.0, %v1029
        %v1031 = vpop.f32.mrb[0].mxu0
        %1032 = vmatprep.mubr.f32.mxu0 0.0
        %1033 = vmatmul.mubr.f32.gmra.mrb[0].mxu0 %v961
        %v1034 = vpop.f32.mrb[0].mxu0
        %v1035 = vadd.f32 0.0, %v1034
        %v1036 = vpop.f32.mrb[0].mxu0
        %1037 = vdwg.mxu0
        %v1039 = vrot.slane %v1030, 2
        %v1041 = vmax.f32 %v1030, %v1039
        %v1042 = vrot.slane %v1030, 4
        %v1044 = vmax.f32 %v1041, %v1042
        %v1045 = vrot.slane %v1030, 6
        %v1047 = vmax.f32 %v1044, %v1045
        %v1048 = vmax.f32 %v1047, %v1035
        %v1050 = vrot.slane %v1035, 2
        %v1052 = vmax.f32 %v1048, %v1050
        %v1053 = vrot.slane %v1035, 4
        %v1055 = vmax.f32 %v1052, %v1053
        %v1056 = vrot.slane %v1035, 6
        %v1058 = vmax.f32 %v1055, %v1056
        %v1060 = vsel %vm876, %v1058, 0
        %1062 = vmatprep.subr.mxu0 0.0
        %1063 = vmatpush1.msra.mxu0 %v1060
        %1064 = vmatprep.subr.mxu0 0.0
        %1065 = vmatpush1.msra.mxu0 0.0
        %1066 = vmatprep.subr.mxu0 0.0
        %1067 = vmatpush1.msra.mxu0 0.0
        %1068 = vmatprep.subr.mxu0 0.0
        %1069 = vmatpush1.msra.mxu0 0.0
        %1070 = vmatprep.subr.mxu0 0.0
        %1071 = vmatpush1.msra.mxu0 0.0
        %1072 = vmatprep.subr.mxu0 0.0
        %1073 = vmatpush1.msra.mxu0 0.0
        %1074 = vmatprep.subr.mxu0 0.0
        %1075 = vmatpush1.msra.mxu0 0.0
        %1076 = vmatprep.subr.mxu0 0.0
        %1077 = vmatpush1.msra.mxu0 0.0
        %1078 = vmatprep.subr.mxu0 0.0
        %1079 = vmatpush1.msra.mxu0 0.0
        %1080 = vmatprep.subr.mxu0 0.0
        %1081 = vmatpush1.msra.mxu0 0.0
        %1082 = vmatprep.subr.mxu0 0.0
        %1083 = vmatpush1.msra.mxu0 0.0
        %1084 = vmatprep.subr.mxu0 0.0
        %1085 = vmatpush1.msra.mxu0 0.0
        %1086 = vmatprep.subr.mxu0 0.0
        %1087 = vmatpush1.msra.mxu0 0.0
        %1088 = vmatprep.subr.mxu0 0.0
        %1089 = vmatpush1.msra.mxu0 0.0
        %1090 = vmatprep.subr.mxu0 0.0
        %1091 = vmatpush1.msra.mxu0 0.0
        %1092 = vmatprep.subr.mxu0 0.0
        %1093 = vmatpush1.msra.mxu0 0.0
        %1094 = vmatprep.subr.mxu0 0.0
        %1095 = vmatpush1.msra.mxu0 0.0
        %1096 = vmatprep.subr.mxu0 0.0
        %1097 = vmatpush1.msra.mxu0 0.0
        %1098 = vmatprep.subr.mxu0 0.0
        %1099 = vmatpush1.msra.mxu0 0.0
        %1100 = vmatprep.subr.mxu0 0.0
        %1101 = vmatpush1.msra.mxu0 0.0
        %1102 = vmatprep.subr.mxu0 0.0
        %1103 = vmatpush1.msra.mxu0 0.0
        %1104 = vmatprep.subr.mxu0 0.0
        %1105 = vmatpush1.msra.mxu0 0.0
        %1106 = vmatprep.subr.mxu0 0.0
        %1107 = vmatpush1.msra.mxu0 0.0
        %1108 = vmatprep.subr.mxu0 0.0
        %1109 = vmatpush1.msra.mxu0 0.0
        %1110 = vmatprep.subr.mxu0 0.0
        %1111 = vmatpush1.msra.mxu0 0.0
        %1112 = vmatprep.subr.mxu0 0.0
        %1113 = vmatpush1.msra.mxu0 0.0
        %1114 = vmatprep.subr.mxu0 0.0
        %1115 = vmatpush1.msra.mxu0 0.0
        %1116 = vmatprep.subr.mxu0 0.0
        %1117 = vmatpush1.msra.mxu0 0.0
        %1118 = vmatprep.subr.mxu0 0.0
        %1119 = vmatpush1.msra.mxu0 0.0
        %1120 = vmatprep.subr.mxu0 0.0
        %1121 = vmatpush1.msra.mxu0 0.0
        %1122 = vmatprep.subr.mxu0 0.0
        %1123 = vmatpush1.msra.mxu0 0.0
        %1124 = vmatprep.subr.mxu0 0.0
        %1125 = vmatpush1.msra.mxu0 0.0
        %1126 = vmatprep.mubr.f32.mxu0 0.0
        %1127 = vmatmul.mubr.f32.gmra.mrb[0].mxu0 %v871
        %v1128 = vpop.f32.mrb[0].mxu0
        %v1129 = vadd.f32 0.0, %v1128
        %v1130 = vpop.f32.mrb[0].mxu0
        %1131 = vmatprep.mubr.f32.mxu0 0.0
        %1132 = vmatmul.mubr.f32.gmra.mrb[0].mxu0 %v874
        %v1133 = vpop.f32.mrb[0].mxu0
        %v1134 = vadd.f32 0.0, %v1133
        %v1135 = vpop.f32.mrb[0].mxu0
        %1136 = vdwg.mxu0
        %v1137 = vsub.f32 %v1030, %v1129
        %v1138 = vsub.f32 %v1035, %v1134
        %v1139 = vmul.f32 %v1137, 1.442695
        %v1140 = vpow.pop %v1139
        %v1141 = vmul.f32 %v1138, 1.442695
        %v1142 = vpow.pop %v1141
        %1143 = vxpose.xlu0.b32.start [1/16] %v861, 128
        %1144 = vxpose.xlu0.b32.cont [2/16] %v862, 128
        %1145 = vxpose.xlu0.b32.cont [3/16] 0.0, 128
        %1146 = vxpose.xlu0.b32.cont [4/16] 0.0, 128
        %1147 = vxpose.xlu0.b32.cont [5/16] 0.0, 128
        %1148 = vxpose.xlu0.b32.cont [6/16] 0.0, 128
        %1149 = vxpose.xlu0.b32.cont [7/16] 0.0, 128
        %1150 = vxpose.xlu0.b32.cont [8/16] 0.0, 128
        %1151 = vxpose.xlu0.b32.cont [9/16] 0.0, 128
        %1152 = vxpose.xlu0.b32.cont [10/16] 0.0, 128
        %1153 = vxpose.xlu0.b32.cont [11/16] 0.0, 128
        %1154 = vxpose.xlu0.b32.cont [12/16] 0.0, 128
        %1155 = vxpose.xlu0.b32.cont [13/16] 0.0, 128
        %1156 = vxpose.xlu0.b32.cont [14/16] 0.0, 128
        %1157 = vxpose.xlu0.b32.cont [15/16] 0.0, 128
        %1158 = vxpose.xlu0.b32.end [16/16] 0.0, 128
        %v1159 = vpop.trf.xlu0
        %v1160 = vpop.trf.xlu0
        %v1161 = vpop.trf.xlu0
        %v1162 = vpop.trf.xlu0
        %v1163 = vpop.trf.xlu0
        %v1164 = vpop.trf.xlu0
        %v1165 = vpop.trf.xlu0
        %v1166 = vpop.trf.xlu0
        %v1167 = vpop.trf.xlu0
        %v1168 = vpop.trf.xlu0
        %v1169 = vpop.trf.xlu0
        %v1170 = vpop.trf.xlu0
        %v1171 = vpop.trf.xlu0
        %v1172 = vpop.trf.xlu0
        %v1173 = vpop.trf.xlu0
        %v1174 = vpop.trf.xlu0
        %vm1175 = vcmask 130048
        %v1177 = vsel %vm1175, %v1159, 0
        %1179 = vmatprep.subr.mxu0 0.0
        %1180 = vmatpush1.msra.mxu0 %v1140
        %1181 = vmatprep.subr.mxu0 0.0
        %1182 = vmatpush1.msra.mxu0 %v1142
        %1183 = vmatprep.subr.mxu0 0.0
        %1184 = vmatpush1.msra.mxu0 0.0
        %1185 = vmatprep.subr.mxu0 0.0
        %1186 = vmatpush1.msra.mxu0 0.0
        %1187 = vmatprep.subr.mxu0 0.0
        %1188 = vmatpush1.msra.mxu0 0.0
        %1189 = vmatprep.subr.mxu0 0.0
        %1190 = vmatpush1.msra.mxu0 0.0
        %1191 = vmatprep.subr.mxu0 0.0
        %1192 = vmatpush1.msra.mxu0 0.0
        %1193 = vmatprep.subr.mxu0 0.0
        %1194 = vmatpush1.msra.mxu0 0.0
        %1195 = vmatprep.subr.mxu0 0.0
        %1196 = vmatpush1.msra.mxu0 0.0
        %1197 = vmatprep.subr.mxu0 0.0
        %1198 = vmatpush1.msra.mxu0 0.0
        %1199 = vmatprep.subr.mxu0 0.0
        %1200 = vmatpush1.msra.mxu0 0.0
        %1201 = vmatprep.subr.mxu0 0.0
        %1202 = vmatpush1.msra.mxu0 0.0
        %1203 = vmatprep.subr.mxu0 0.0
        %1204 = vmatpush1.msra.mxu0 0.0
        %1205 = vmatprep.subr.mxu0 0.0
        %1206 = vmatpush1.msra.mxu0 0.0
        %1207 = vmatprep.subr.mxu0 0.0
        %1208 = vmatpush1.msra.mxu0 0.0
        %1209 = vmatprep.subr.mxu0 0.0
        %1210 = vmatpush1.msra.mxu0 0.0
        %1211 = vmatprep.subr.mxu0 0.0
        %1212 = vmatpush1.msra.mxu0 0.0
        %1213 = vmatprep.subr.mxu0 0.0
        %1214 = vmatpush1.msra.mxu0 0.0
        %1215 = vmatprep.subr.mxu0 0.0
        %1216 = vmatpush1.msra.mxu0 0.0
        %1217 = vmatprep.subr.mxu0 0.0
        %1218 = vmatpush1.msra.mxu0 0.0
        %1219 = vmatprep.subr.mxu0 0.0
        %1220 = vmatpush1.msra.mxu0 0.0
        %1221 = vmatprep.subr.mxu0 0.0
        %1222 = vmatpush1.msra.mxu0 0.0
        %1223 = vmatprep.subr.mxu0 0.0
        %1224 = vmatpush1.msra.mxu0 0.0
        %1225 = vmatprep.subr.mxu0 0.0
        %1226 = vmatpush1.msra.mxu0 0.0
        %1227 = vmatprep.subr.mxu0 0.0
        %1228 = vmatpush1.msra.mxu0 0.0
        %1229 = vmatprep.subr.mxu0 0.0
        %1230 = vmatpush1.msra.mxu0 0.0
        %1231 = vmatprep.subr.mxu0 0.0
        %1232 = vmatpush1.msra.mxu0 0.0
        %1233 = vmatprep.subr.mxu0 0.0
        %1234 = vmatpush1.msra.mxu0 0.0
        %1235 = vmatprep.subr.mxu0 0.0
        %1236 = vmatpush1.msra.mxu0 0.0
        %1237 = vmatprep.subr.mxu0 0.0
        %1238 = vmatpush1.msra.mxu0 0.0
        %1239 = vmatprep.subr.mxu0 0.0
        %1240 = vmatpush1.msra.mxu0 0.0
        %1241 = vmatprep.subr.mxu0 0.0
        %1242 = vmatpush1.msra.mxu0 0.0
        %1243 = vmatprep.mubr.f32.mxu0 0.0
        %1244 = vmatmul.mubr.f32.gmra.mrb[0].mxu0 %v1177
        %v1245 = vpop.f32.mrb[0].mxu0
        %v1246 = vadd.f32 0.0, %v1245
        %v1247 = vpop.f32.mrb[0].mxu0
        %1248 = vdwg.mxu0
        %v1249 = vrcp.pop %v1246
        %v1251 = vsel %vm876, %v1249, 0
        %1253 = vmatprep.subr.mxu0 0.0
        %1254 = vmatpush1.msra.mxu0 %v1251
        %1255 = vmatprep.subr.mxu0 0.0
        %1256 = vmatpush1.msra.mxu0 0.0
        %1257 = vmatprep.subr.mxu0 0.0
        %1258 = vmatpush1.msra.mxu0 0.0
        %1259 = vmatprep.subr.mxu0 0.0
        %1260 = vmatpush1.msra.mxu0 0.0
        %1261 = vmatprep.subr.mxu0 0.0
        %1262 = vmatpush1.msra.mxu0 0.0
        %1263 = vmatprep.subr.mxu0 0.0
        %1264 = vmatpush1.msra.mxu0 0.0
        %1265 = vmatprep.subr.mxu0 0.0
        %1266 = vmatpush1.msra.mxu0 0.0
        %1267 = vmatprep.subr.mxu0 0.0
        %1268 = vmatpush1.msra.mxu0 0.0
        %1269 = vmatprep.subr.mxu0 0.0
        %1270 = vmatpush1.msra.mxu0 0.0
        %1271 = vmatprep.subr.mxu0 0.0
        %1272 = vmatpush1.msra.mxu0 0.0
        %1273 = vmatprep.subr.mxu0 0.0
        %1274 = vmatpush1.msra.mxu0 0.0
        %1275 = vmatprep.subr.mxu0 0.0
        %1276 = vmatpush1.msra.mxu0 0.0
        %1277 = vmatprep.subr.mxu0 0.0
        %1278 = vmatpush1.msra.mxu0 0.0
        %1279 = vmatprep.subr.mxu0 0.0
        %1280 = vmatpush1.msra.mxu0 0.0
        %1281 = vmatprep.subr.mxu0 0.0
        %1282 = vmatpush1.msra.mxu0 0.0
        %1283 = vmatprep.subr.mxu0 0.0
        %1284 = vmatpush1.msra.mxu0 0.0
        %1285 = vmatprep.subr.mxu0 0.0
        %1286 = vmatpush1.msra.mxu0 0.0
        %1287 = vmatprep.subr.mxu0 0.0
        %1288 = vmatpush1.msra.mxu0 0.0
        %1289 = vmatprep.subr.mxu0 0.0
        %1290 = vmatpush1.msra.mxu0 0.0
        %1291 = vmatprep.subr.mxu0 0.0
        %1292 = vmatpush1.msra.mxu0 0.0
        %1293 = vmatprep.subr.mxu0 0.0
        %1294 = vmatpush1.msra.mxu0 0.0
        %1295 = vmatprep.subr.mxu0 0.0
        %1296 = vmatpush1.msra.mxu0 0.0
        %1297 = vmatprep.subr.mxu0 0.0
        %1298 = vmatpush1.msra.mxu0 0.0
        %1299 = vmatprep.subr.mxu0 0.0
        %1300 = vmatpush1.msra.mxu0 0.0
        %1301 = vmatprep.subr.mxu0 0.0
        %1302 = vmatpush1.msra.mxu0 0.0
        %1303 = vmatprep.subr.mxu0 0.0
        %1304 = vmatpush1.msra.mxu0 0.0
        %1305 = vmatprep.subr.mxu0 0.0
        %1306 = vmatpush1.msra.mxu0 0.0
        %1307 = vmatprep.subr.mxu0 0.0
        %1308 = vmatpush1.msra.mxu0 0.0
        %1309 = vmatprep.subr.mxu0 0.0
        %1310 = vmatpush1.msra.mxu0 0.0
        %1311 = vmatprep.subr.mxu0 0.0
        %1312 = vmatpush1.msra.mxu0 0.0
        %1313 = vmatprep.subr.mxu0 0.0
        %1314 = vmatpush1.msra.mxu0 0.0
        %1315 = vmatprep.subr.mxu0 0.0
        %1316 = vmatpush1.msra.mxu0 0.0
        %1317 = vmatprep.mubr.f32.mxu0 0.0
        %1318 = vmatmul.mubr.f32.gmra.mrb[0].mxu0 %v871
        %v1319 = vpop.f32.mrb[0].mxu0
        %v1320 = vadd.f32 0.0, %v1319
        %v1321 = vpop.f32.mrb[0].mxu0
        %1322 = vmatprep.mubr.f32.mxu0 0.0
        %1323 = vmatmul.mubr.f32.gmra.mrb[0].mxu0 %v874
        %v1324 = vpop.f32.mrb[0].mxu0
        %v1325 = vadd.f32 0.0, %v1324
        %v1326 = vpop.f32.mrb[0].mxu0
        %1327 = vdwg.mxu0
        %v1328 = vmul.f32 %v1140, %v1320
        %v1329 = vmul.f32 %v1142, %v1325
        %vm1330 = vcmask 31744
        %v1331 = vsel %vm1330, %v1328, 0.0
        %1332 = vadd.xlane.f32.xlu0 %v1331
        %v1333 = vpop.xlane.xlu0 %1332
        %v1334 = vsel %vm1330, %v1329, 0.0
        %1335 = vadd.xlane.f32.xlu0 %v1334
        %v1336 = vpop.xlane.xlu0 %1335
        %v1337 = vmul.f32 %v1333, 0.25
        %v1338 = vmul.f32 %v1336, 0.25
        %v1339 = vmul.f32 %v1337, %v867
        %v1340 = vmul.f32 %v1338, %v868
        %1341 = vmatprep.subr.mxu0 0.0
        %1342 = vmatpush1.msra.mxu0 %v1339
        %1343 = vmatprep.subr.mxu0 0.0
        %1344 = vmatpush1.msra.mxu0 %v1340
        %1345 = vmatprep.subr.mxu0 0.0
        %1346 = vmatpush1.msra.mxu0 0.0
        %1347 = vmatprep.subr.mxu0 0.0
        %1348 = vmatpush1.msra.mxu0 0.0
        %1349 = vmatprep.subr.mxu0 0.0
        %1350 = vmatpush1.msra.mxu0 0.0
        %1351 = vmatprep.subr.mxu0 0.0
        %1352 = vmatpush1.msra.mxu0 0.0
        %1353 = vmatprep.subr.mxu0 0.0
        %1354 = vmatpush1.msra.mxu0 0.0
        %1355 = vmatprep.subr.mxu0 0.0
        %1356 = vmatpush1.msra.mxu0 0.0
        %1357 = vmatprep.subr.mxu0 0.0
        %1358 = vmatpush1.msra.mxu0 0.0
        %1359 = vmatprep.subr.mxu0 0.0
        %1360 = vmatpush1.msra.mxu0 0.0
        %1361 = vmatprep.subr.mxu0 0.0
        %1362 = vmatpush1.msra.mxu0 0.0
        %1363 = vmatprep.subr.mxu0 0.0
        %1364 = vmatpush1.msra.mxu0 0.0
        %1365 = vmatprep.subr.mxu0 0.0
        %1366 = vmatpush1.msra.mxu0 0.0
        %1367 = vmatprep.subr.mxu0 0.0
        %1368 = vmatpush1.msra.mxu0 0.0
        %1369 = vmatprep.subr.mxu0 0.0
        %1370 = vmatpush1.msra.mxu0 0.0
        %1371 = vmatprep.subr.mxu0 0.0
        %1372 = vmatpush1.msra.mxu0 0.0
        %1373 = vmatprep.subr.mxu0 0.0
        %1374 = vmatpush1.msra.mxu0 0.0
        %1375 = vmatprep.subr.mxu0 0.0
        %1376 = vmatpush1.msra.mxu0 0.0
        %1377 = vmatprep.subr.mxu0 0.0
        %1378 = vmatpush1.msra.mxu0 0.0
        %1379 = vmatprep.subr.mxu0 0.0
        %1380 = vmatpush1.msra.mxu0 0.0
        %1381 = vmatprep.subr.mxu0 0.0
        %1382 = vmatpush1.msra.mxu0 0.0
        %1383 = vmatprep.subr.mxu0 0.0
        %1384 = vmatpush1.msra.mxu0 0.0
        %1385 = vmatprep.subr.mxu0 0.0
        %1386 = vmatpush1.msra.mxu0 0.0
        %1387 = vmatprep.subr.mxu0 0.0
        %1388 = vmatpush1.msra.mxu0 0.0
        %1389 = vmatprep.subr.mxu0 0.0
        %1390 = vmatpush1.msra.mxu0 0.0
        %1391 = vmatprep.subr.mxu0 0.0
        %1392 = vmatpush1.msra.mxu0 0.0
        %1393 = vmatprep.subr.mxu0 0.0
        %1394 = vmatpush1.msra.mxu0 0.0
        %1395 = vmatprep.subr.mxu0 0.0
        %1396 = vmatpush1.msra.mxu0 0.0
        %1397 = vmatprep.subr.mxu0 0.0
        %1398 = vmatpush1.msra.mxu0 0.0
        %1399 = vmatprep.subr.mxu0 0.0
        %1400 = vmatpush1.msra.mxu0 0.0
        %1401 = vmatprep.subr.mxu0 0.0
        %1402 = vmatpush1.msra.mxu0 0.0
        %1403 = vmatprep.subr.mxu0 0.0
        %1404 = vmatpush1.msra.mxu0 0.0
        %1405 = vmatprep.mubr.f32.mxu0 0.0
        %1406 = vmatmul.mubr.f32.gmra.mrb[0].mxu0 %v1177
        %v1407 = vpop.f32.mrb[0].mxu0
        %v1408 = vadd.f32 0.0, %v1407
        %v1409 = vpop.f32.mrb[0].mxu0
        %1410 = vdwg.mxu0
        %vm1411 = vcmask 58368
        %1412 = vst.msk [vmem:[%s557] sm:$0x3] %vm1411, %v1408
        %v1414 = vsel %vm1330, %v1328, 0
        %v1417 = vsel %vm1330, %v1329, 0
        %v1420 = vsel %vm1330, %v863, 0
        %v1423 = vsel %vm1330, %v864, 0
        %v1426 = vsel %vm1330, %v865, 0
        %v1429 = vsel %vm1330, %v866, 0
        %1431 = vmatprep.subr.mxu0 0.0
        %1432 = vmatpush1.xpose.msra.mxu0 %v1420
        %1433 = vmatprep.subr.mxu0 0.0
        %1434 = vmatpush1.xpose.msra.mxu0 %v1423
        %1435 = vmatprep.subr.mxu0 0.0
        %1436 = vmatpush1.xpose.msra.mxu0 %v1426
        %1437 = vmatprep.subr.mxu0 0.0
        %1438 = vmatpush1.xpose.msra.mxu0 %v1429
        %1439 = vmatprep.subr.mxu0 0.0
        %1440 = vmatpush1.xpose.msra.mxu0 0.0
        %1441 = vmatprep.subr.mxu0 0.0
        %1442 = vmatpush1.xpose.msra.mxu0 0.0
        %1443 = vmatprep.subr.mxu0 0.0
        %1444 = vmatpush1.xpose.msra.mxu0 0.0
        %1445 = vmatprep.subr.mxu0 0.0
        %1446 = vmatpush1.xpose.msra.mxu0 0.0
        %1447 = vmatprep.subr.mxu0 0.0
        %1448 = vmatpush1.xpose.msra.mxu0 0.0
        %1449 = vmatprep.subr.mxu0 0.0
        %1450 = vmatpush1.xpose.msra.mxu0 0.0
        %1451 = vmatprep.subr.mxu0 0.0
        %1452 = vmatpush1.xpose.msra.mxu0 0.0
        %1453 = vmatprep.subr.mxu0 0.0
        %1454 = vmatpush1.xpose.msra.mxu0 0.0
        %1455 = vmatprep.subr.mxu0 0.0
        %1456 = vmatpush1.xpose.msra.mxu0 0.0
        %1457 = vmatprep.subr.mxu0 0.0
        %1458 = vmatpush1.xpose.msra.mxu0 0.0
        %1459 = vmatprep.subr.mxu0 0.0
        %1460 = vmatpush1.xpose.msra.mxu0 0.0
        %1461 = vmatprep.subr.mxu0 0.0
        %1462 = vmatpush1.xpose.msra.mxu0 0.0
        %1463 = vmatprep.subr.mxu0 0.0
        %1464 = vmatpush1.xpose.msra.mxu0 0.0
        %1465 = vmatprep.subr.mxu0 0.0
        %1466 = vmatpush1.xpose.msra.mxu0 0.0
        %1467 = vmatprep.subr.mxu0 0.0
        %1468 = vmatpush1.xpose.msra.mxu0 0.0
        %1469 = vmatprep.subr.mxu0 0.0
        %1470 = vmatpush1.xpose.msra.mxu0 0.0
        %1471 = vmatprep.subr.mxu0 0.0
        %1472 = vmatpush1.xpose.msra.mxu0 0.0
        %1473 = vmatprep.subr.mxu0 0.0
        %1474 = vmatpush1.xpose.msra.mxu0 0.0
        %1475 = vmatprep.subr.mxu0 0.0
        %1476 = vmatpush1.xpose.msra.mxu0 0.0
        %1477 = vmatprep.subr.mxu0 0.0
        %1478 = vmatpush1.xpose.msra.mxu0 0.0
        %1479 = vmatprep.subr.mxu0 0.0
        %1480 = vmatpush1.xpose.msra.mxu0 0.0
        %1481 = vmatprep.subr.mxu0 0.0
        %1482 = vmatpush1.xpose.msra.mxu0 0.0
        %1483 = vmatprep.subr.mxu0 0.0
        %1484 = vmatpush1.xpose.msra.mxu0 0.0
        %1485 = vmatprep.subr.mxu0 0.0
        %1486 = vmatpush1.xpose.msra.mxu0 0.0
        %1487 = vmatprep.subr.mxu0 0.0
        %1488 = vmatpush1.xpose.msra.mxu0 0.0
        %1489 = vmatprep.subr.mxu0 0.0
        %1490 = vmatpush1.xpose.msra.mxu0 0.0
        %1491 = vmatprep.subr.mxu0 0.0
        %1492 = vmatpush1.xpose.msra.mxu0 0.0
        %1493 = vmatprep.subr.mxu0 0.0
        %1494 = vmatpush1.xpose.msra.mxu0 0.0
        %1495 = vmatprep.mubr.f32.mxu0 0.0
        %1496 = vmatmul.mubr.f32.gmra.mrb[0].mxu0 %v1414
        %v1497 = vpop.f32.mrb[0].mxu0
        %v1498 = vadd.f32 0.0, %v1497
        %v1499 = vpop.f32.mrb[0].mxu0
        %1500 = vmatprep.mubr.f32.mxu0 0.0
        %1501 = vmatmul.mubr.f32.gmra.mrb[0].mxu0 %v1417
        %v1502 = vpop.f32.mrb[0].mxu0
        %v1503 = vadd.f32 0.0, %v1502
        %v1504 = vpop.f32.mrb[0].mxu0
        %1505 = vdwg.mxu0
        %v1506 = vmul.f32 %v1498, %v853
        %v1507 = vmul.f32 %v1503, %v858
        %1508 = vmatprep.subr.mxu0 0.0
        %1509 = vmatpush1.msra.mxu0 %v1506
        %1510 = vmatprep.subr.mxu0 0.0
        %1511 = vmatpush1.msra.mxu0 %v1507
        %1512 = vmatprep.subr.mxu0 0.0
        %1513 = vmatpush1.msra.mxu0 0.0
        %1514 = vmatprep.subr.mxu0 0.0
        %1515 = vmatpush1.msra.mxu0 0.0
        %1516 = vmatprep.subr.mxu0 0.0
        %1517 = vmatpush1.msra.mxu0 0.0
        %1518 = vmatprep.subr.mxu0 0.0
        %1519 = vmatpush1.msra.mxu0 0.0
        %1520 = vmatprep.subr.mxu0 0.0
        %1521 = vmatpush1.msra.mxu0 0.0
        %1522 = vmatprep.subr.mxu0 0.0
        %1523 = vmatpush1.msra.mxu0 0.0
        %1524 = vmatprep.subr.mxu0 0.0
        %1525 = vmatpush1.msra.mxu0 0.0
        %1526 = vmatprep.subr.mxu0 0.0
        %1527 = vmatpush1.msra.mxu0 0.0
        %1528 = vmatprep.subr.mxu0 0.0
        %1529 = vmatpush1.msra.mxu0 0.0
        %1530 = vmatprep.subr.mxu0 0.0
        %1531 = vmatpush1.msra.mxu0 0.0
        %1532 = vmatprep.subr.mxu0 0.0
        %1533 = vmatpush1.msra.mxu0 0.0
        %1534 = vmatprep.subr.mxu0 0.0
        %1535 = vmatpush1.msra.mxu0 0.0
        %1536 = vmatprep.subr.mxu0 0.0
        %1537 = vmatpush1.msra.mxu0 0.0
        %1538 = vmatprep.subr.mxu0 0.0
        %1539 = vmatpush1.msra.mxu0 0.0
        %1540 = vmatprep.subr.mxu0 0.0
        %1541 = vmatpush1.msra.mxu0 0.0
        %1542 = vmatprep.subr.mxu0 0.0
        %1543 = vmatpush1.msra.mxu0 0.0
        %1544 = vmatprep.subr.mxu0 0.0
        %1545 = vmatpush1.msra.mxu0 0.0
        %1546 = vmatprep.subr.mxu0 0.0
        %1547 = vmatpush1.msra.mxu0 0.0
        %1548 = vmatprep.subr.mxu0 0.0
        %1549 = vmatpush1.msra.mxu0 0.0
        %1550 = vmatprep.subr.mxu0 0.0
        %1551 = vmatpush1.msra.mxu0 0.0
        %1552 = vmatprep.subr.mxu0 0.0
        %1553 = vmatpush1.msra.mxu0 0.0
        %1554 = vmatprep.subr.mxu0 0.0
        %1555 = vmatpush1.msra.mxu0 0.0
        %1556 = vmatprep.subr.mxu0 0.0
        %1557 = vmatpush1.msra.mxu0 0.0
        %1558 = vmatprep.subr.mxu0 0.0
        %1559 = vmatpush1.msra.mxu0 0.0
        %1560 = vmatprep.subr.mxu0 0.0
        %1561 = vmatpush1.msra.mxu0 0.0
        %1562 = vmatprep.subr.mxu0 0.0
        %1563 = vmatpush1.msra.mxu0 0.0
        %1564 = vmatprep.subr.mxu0 0.0
        %1565 = vmatpush1.msra.mxu0 0.0
        %1566 = vmatprep.subr.mxu0 0.0
        %1567 = vmatpush1.msra.mxu0 0.0
        %1568 = vmatprep.subr.mxu0 0.0
        %1569 = vmatpush1.msra.mxu0 0.0
        %1570 = vmatprep.subr.mxu0 0.0
        %1571 = vmatpush1.msra.mxu0 0.0
        %1572 = vmatprep.mubr.f32.mxu0 0.0
        %1573 = vmatmul.mubr.f32.gmra.mrb[0].mxu0 %v1177
        %v1574 = vpop.f32.mrb[0].mxu0
        %v1575 = vadd.f32 0.0, %v1574
        %v1576 = vpop.f32.mrb[0].mxu0
        %1577 = vdwg.mxu0
        %v1578 = vld [vmem:[#allocation8] sm:$0xff]
        %v1579 = vld [vmem:[#allocation8 + $0x8] sm:$0xff]
        %v1580 = vld [vmem:[#allocation8 + $0x10] sm:$0xff]
        %v1581 = vld [vmem:[#allocation8 + $0x18] sm:$0xff]
        %v1582 = vld [vmem:[%s9] sm:$0x1]
        %v1584 = vlaneseq
        %v1585 = vshrl.u32 %v1584, 7
        %v1586 = vsub.s32 0, %v1585
        %v1587 = vrot.slane %v1582, %v1586
        %v1590 = vsel %vm572, %v1575, 0
        %v1593 = vsel %vm572, %v1578, 0
        %v1596 = vsel %vm572, %v1579, 0
        %v1599 = vsel %vm572, %v1580, 0
        %v1602 = vsel %vm572, %v1581, 0
        %1604 = vmatprep.subr.mxu0 0.0
        %1605 = vmatpush1.xpose.msra.mxu0 %v1593
        %1606 = vmatprep.subr.mxu0 0.0
        %1607 = vmatpush1.xpose.msra.mxu0 %v1596
        %1608 = vmatprep.subr.mxu0 0.0
        %1609 = vmatpush1.xpose.msra.mxu0 %v1599
        %1610 = vmatprep.subr.mxu0 0.0
        %1611 = vmatpush1.xpose.msra.mxu0 %v1602
        %1612 = vmatprep.subr.mxu0 0.0
        %1613 = vmatpush1.xpose.msra.mxu0 0.0
        %1614 = vmatprep.subr.mxu0 0.0
        %1615 = vmatpush1.xpose.msra.mxu0 0.0
        %1616 = vmatprep.subr.mxu0 0.0
        %1617 = vmatpush1.xpose.msra.mxu0 0.0
        %1618 = vmatprep.subr.mxu0 0.0
        %1619 = vmatpush1.xpose.msra.mxu0 0.0
        %1620 = vmatprep.subr.mxu0 0.0
        %1621 = vmatpush1.xpose.msra.mxu0 0.0
        %1622 = vmatprep.subr.mxu0 0.0
        %1623 = vmatpush1.xpose.msra.mxu0 0.0
        %1624 = vmatprep.subr.mxu0 0.0
        %1625 = vmatpush1.xpose.msra.mxu0 0.0
        %1626 = vmatprep.subr.mxu0 0.0
        %1627 = vmatpush1.xpose.msra.mxu0 0.0
        %1628 = vmatprep.subr.mxu0 0.0
        %1629 = vmatpush1.xpose.msra.mxu0 0.0
        %1630 = vmatprep.subr.mxu0 0.0
        %1631 = vmatpush1.xpose.msra.mxu0 0.0
        %1632 = vmatprep.subr.mxu0 0.0
        %1633 = vmatpush1.xpose.msra.mxu0 0.0
        %1634 = vmatprep.subr.mxu0 0.0
        %1635 = vmatpush1.xpose.msra.mxu0 0.0
        %1636 = vmatprep.subr.mxu0 0.0
        %1637 = vmatpush1.xpose.msra.mxu0 0.0
        %1638 = vmatprep.subr.mxu0 0.0
        %1639 = vmatpush1.xpose.msra.mxu0 0.0
        %1640 = vmatprep.subr.mxu0 0.0
        %1641 = vmatpush1.xpose.msra.mxu0 0.0
        %1642 = vmatprep.subr.mxu0 0.0
        %1643 = vmatpush1.xpose.msra.mxu0 0.0
        %1644 = vmatprep.subr.mxu0 0.0
        %1645 = vmatpush1.xpose.msra.mxu0 0.0
        %1646 = vmatprep.subr.mxu0 0.0
        %1647 = vmatpush1.xpose.msra.mxu0 0.0
        %1648 = vmatprep.subr.mxu0 0.0
        %1649 = vmatpush1.xpose.msra.mxu0 0.0
        %1650 = vmatprep.subr.mxu0 0.0
        %1651 = vmatpush1.xpose.msra.mxu0 0.0
        %1652 = vmatprep.subr.mxu0 0.0
        %1653 = vmatpush1.xpose.msra.mxu0 0.0
        %1654 = vmatprep.subr.mxu0 0.0
        %1655 = vmatpush1.xpose.msra.mxu0 0.0
        %1656 = vmatprep.subr.mxu0 0.0
        %1657 = vmatpush1.xpose.msra.mxu0 0.0
        %1658 = vmatprep.subr.mxu0 0.0
        %1659 = vmatpush1.xpose.msra.mxu0 0.0
        %1660 = vmatprep.subr.mxu0 0.0
        %1661 = vmatpush1.xpose.msra.mxu0 0.0
        %1662 = vmatprep.subr.mxu0 0.0
        %1663 = vmatpush1.xpose.msra.mxu0 0.0
        %1664 = vmatprep.subr.mxu0 0.0
        %1665 = vmatpush1.xpose.msra.mxu0 0.0
        %1666 = vmatprep.subr.mxu0 0.0
        %1667 = vmatpush1.xpose.msra.mxu0 0.0
        %1668 = vmatprep.mubr.f32.mxu0 0.0
        %1669 = vmatmul.mubr.f32.gmra.mrb[0].mxu0 %v1590
        %v1670 = vpop.f32.mrb[0].mxu0
        %v1671 = vadd.f32 %v1587, %v1670
        %v1672 = vpop.f32.mrb[0].mxu0
        %1673 = vdwg.mxu0
        %vm1674 = vcmask 254976
        %1675 = vst.msk [vmem:[%s542] sm:$0x3] %vm1674, %v1671
        %s1676 = sand.u32 %s325, 1
        %s1677 = scalar_lea.sflag [#allocation4], %s1676
        %s1678 = sand.u32 %s325, 1
        %s1679 = smul.addr %s1678, 2
        %s1680 = scalar_lea.vmem [#allocation10], %s1679
        %p1681 = scmp.lt.s32.totalorder %s34, 7
        %s1682 = scalar_select %p1681, %s34, 7
        %s1683 = smul.addr %s1682, 2
        %s1684 = scalar_lea.vmem %s14, %s1683
        // Predicated region
        $region89: #{enc_dec_mha_forward.1} parent=71 // pred_check
          %p1685 = pneg %p335
        $region90: #{enc_dec_mha_forward.1} parent=71 // pred_check_branch
          %1687 = sbr.rel (%p1685) target = $region92
        $region91: #{enc_dec_mha_forward.1} parent=71 // pred_region
          %s1689 = ssub.s32 32, 32
          %1690 = vsyncadd %s1677, %s1689
          %s1691 = smul.addr %s34, 32
          %s1692 = scalar_lea.hbm %s13, %s1691
          %s1694 = sshll.u32 %s1680, 4
          %s1695 = int_to_ptr.vmem [resolvable:$true] %s1694
          %1697 = dma.vmem_to_hbm [thread:$0]  %s1695, 32, %s1692, %s1677
        $region92: #{enc_dec_mha_forward.1} parent=71 // pred_fallthru
          _
        // Predicated region
        $region93: #{enc_dec_mha_forward.1} parent=71 // pred_check
          %p1698 = pneg %p361
        $region94: #{enc_dec_mha_forward.1} parent=71 // pred_check_branch
          %1700 = sbr.rel (%p1698) target = $region96
        $region95: #{enc_dec_mha_forward.1} parent=71 // pred_region
          _
        $region96: #{enc_dec_mha_forward.1} parent=71 // pred_fallthru
          _
      $region72: #{enc_dec_mha_forward.1} parent=5 // pred_fallthru
        _
      %p1701 = scmp.le.s32.totalorder 2, %s29
      // Predicated region
      $region97: #{enc_dec_mha_forward.1} parent=5 // pred_check
        %p1702 = pneg %p1701
      $region98: #{enc_dec_mha_forward.1} parent=5 // pred_check_branch
        %1704 = sbr.rel (%p1702) target = $region100
      $region99: #{enc_dec_mha_forward.1} parent=5 // pred_region
        %s1705 = ssub.s32 %s29, 2
        // Predicated region
        $region101: #{enc_dec_mha_forward.1} parent=99 // pred_check
          %p1706 = pneg %p341
        $region102: #{enc_dec_mha_forward.1} parent=99 // pred_check_branch
          %1708 = sbr.rel (%p1706) target = $region104
        $region103: #{enc_dec_mha_forward.1} parent=99 // pred_region
          %s1709 = sand.u32 %s326, 1
          %s1710 = scalar_lea.sflag [#allocation4], %s1709
          %s1711 = sand.u32 %s326, 1
          %s1712 = smul.addr %s1711, 2
          %s1713 = scalar_lea.vmem [#allocation10], %s1712
          %1714 = dma.done %s1710, 32
        $region104: #{enc_dec_mha_forward.1} parent=99 // pred_fallthru
          _
        // Predicated region
        $region105: #{enc_dec_mha_forward.1} parent=99 // pred_check
          %p1715 = pneg %p367
        $region106: #{enc_dec_mha_forward.1} parent=99 // pred_check_branch
          %1717 = sbr.rel (%p1715) target = $region108
        $region107: #{enc_dec_mha_forward.1} parent=99 // pred_region
          %p1718 = scmp.lt.s32.totalorder %s35, 7
          %s1719 = scalar_select %p1718, %s35, 7
          %s1720 = smul.addr %s1719, 2
          %s1721 = scalar_lea.vmem %s14, %s1720
        $region108: #{enc_dec_mha_forward.1} parent=99 // pred_fallthru
          _
      $region100: #{enc_dec_mha_forward.1} parent=5 // pred_fallthru
        _
    $region6: #{enc_dec_mha_forward.1} parent=1 // loop_footer
      %s33 = sadd.s32 1, %s29
    $region7: #{enc_dec_mha_forward.1} parent=1 // loop_footer_branch
      %28 = sbr.rel target = $region3
    $region8: #{enc_dec_mha_forward.1} parent=1 // loop_exit
      _
    %1722 = vsyncpa [#allocation3], 1
    %s1723 = scalar_lea.sflag [#allocation3], 1
    %1724 = vsyncpa %s1723, 1
    %1725 = vsyncpa [#allocation6], 1
    %1726 = vsyncpa [#allocation9], 1
    %1727 = vsyncpa [#allocation4], 1
    %s1728 = scalar_lea.sflag [#allocation4], 1
    %1729 = vsyncpa %s1728, 1

</llo_original>
